<compile_context>
chip_gen: v7x
topology: tpu7x:2x2x1
jax: 0.10.0
libtpu: 0.0.40
codegen_flags: <defaults>
</compile_context>

<pallas_src>
import functools

import jax
import jax.numpy as jnp
from jax.experimental import pallas as pl
from jax.experimental.pallas import tpu as pltpu

# ----------------------------- hyper-parameters ------------------------------
NUM_FEATURES = 16
HIDDEN_DIM = [32, 16]          # two GNN layers
NUM_NODES = 8
LAMBDA_SELF = 1.0
LAMBDA_NEIGHBOR = 0.0001
LAMBDA_DEGREE = 10.0
GIN_EPS = 0.0                  # TODO(synk): GINLayer eps may be learnable in the reference; baked constant here
BN_EPS = 1e-5

LANES = 128
SUBLANES = 8


# ------------------------------ fused Pallas kernel ---------------------------
def _fused_forward_kernel(adj_ref, h0_ref, buf_ref, loss_ref, h_last_ref, *,
                          layout, num_layers, gnn_nlin, dm_nlin, gin_eps,
                          lambda_self, lambda_neighbor, lambda_degree):
    """One kernel = full ISOC_VGAE forward. All weights live in one packed VMEM buffer."""
    L = num_layers

    def get(name):
        # Lazy load at point of use; static offsets -> free ref view, single vld.
        r0, (nr, nc) = layout[name]
        return buf_ref[r0:r0 + nr, 0:nc]

    def matmul(x, w):
        return jnp.dot(x, w, preferred_element_type=jnp.float32)

    def mean_all(x):
        # mean over all elements -> (1,1); staged lane-then-sublane reduction.
        s = jnp.sum(x, axis=1, keepdims=True)
        s = jnp.sum(s, axis=0, keepdims=True)
        return s * (1.0 / float(x.shape[0] * x.shape[1]))

    adj = adj_ref[...]                          # [N, N]
    h0 = h0_ref[...]                            # [N, F]
    deg = get('deg')                            # [N, 1]
    inv_deg1 = pl.reciprocal(deg + 1.0, approx=True)

    # ---------------- encoder (GIN) ----------------
    aggs = []                                   # saved for decoder's neighborhood mean
    h_list = []
    h = h0
    for l in range(L):
        agg = (1.0 + gin_eps) * h + matmul(adj, h)     # (1+eps)*h + A@h
        aggs.append(agg)
        x = agg
        n = gnn_nlin[l]
        for i in range(n):
            x = matmul(x, get(f'gnn{l}_w{i}')) + get(f'gnn{l}_b{i}')
            if i < n - 1:
                x = jnp.maximum(x, 0.0)                 # ReLU between hidden layers
        if l != L - 1:
            # TODO(synk): GINLayer internals not shown in the reference; intended semantics
            # used: BatchNorm1d with batch statistics (gamma=1, beta=0) + ReLU on non-final layers.
            mu = jnp.mean(x, axis=0, keepdims=True)
            var = jnp.mean((x - mu) ** 2, axis=0, keepdims=True)
            x = (x - mu) * jax.lax.rsqrt(var + BN_EPS)
            x = jnp.maximum(x, 0.0)
        h = x
        h_list.append(h)

    # ---------------- inverse decoder + losses ----------------
    loss_self = jnp.zeros((1, 1), jnp.float32)
    kl_neighbor = jnp.zeros((1, 1), jnp.float32)
    loss_degree = jnp.zeros((1, 1), jnp.float32)
    mean_prior = None
    for idx in range(L):
        layer = L - 1 - idx
        target = h0 if layer == 0 else h_list[layer - 1]
        hd = h_list[layer]
        d = hd.shape[1]
        out = target.shape[1]

        # One MXU matmul feeds the first layer of all three heads ([d, 3d]).
        u = jnp.maximum(matmul(hd, get(f'head{idx}_w1')) + get(f'head{idx}_b1'), 0.0)
        # Block-diagonal fused second stage: [3d, out | out | d] in a single matmul.
        v = matmul(u, get(f'head{idx}_w2')) + get(f'head{idx}_b2')
        mean = v[:, 0:out]
        log_std = v[:, out:2 * out]
        dh = jnp.maximum(v[:, 2 * out:2 * out + d], 0.0)
        rec_deg = jnp.maximum(
            matmul(dh, get(f'head{idx}_wd3')) + get(f'head{idx}_bd3'), 0.0)   # F.relu(reconstruct_degree)

        if idx > 0:
            x = mean_prior
            n = dm_nlin[idx - 1]
            for i in range(n):
                x = matmul(x, get(f'dm{idx - 1}_w{i}')) + get(f'dm{idx - 1}_b{i}')
                if i < n - 1:
                    x = jnp.maximum(x, 0.0)
            mean_post = mean + x
        else:
            mean_post = mean                                   # mean_prior == 0.0 in reference

        std = jnp.exp(log_std)
        z = mean_post + get(f'noise{idx}') * std               # reparameterization

        # MSELoss(target, z): mean over all elements.
        loss_self = loss_self + mean_all((target - z) ** 2)

        # Neighborhood mean reuses the encoder aggregation:
        # (A@target + target)/(deg+1) == (agg - eps*target)/(deg+1)
        if gin_eps == 0.0:
            h_mean = aggs[layer] * inv_deg1
        else:
            h_mean = (aggs[layer] - gin_eps * target) * inv_deg1
        diff = mean_post - h_mean
        # kl_normal: 0.5 * mean(-1 - 2*log_std + diff^2 + exp(2*log_std)) over all elements.
        kl_neighbor = kl_neighbor + 0.5 * mean_all(
            -1.0 - 2.0 * log_std + diff * diff + std * std)

        loss_degree = loss_degree + mean_all((rec_deg - deg) ** 2)

        mean_prior = z

    loss = (lambda_self * loss_self
            + lambda_neighbor * kl_neighbor
            + lambda_degree * loss_degree) * (1.0 / float(L))
    loss_ref[...] = loss
    h_last_ref[...] = h_list[-1]


# ------------------------------- host-side packing ----------------------------
def _block_diag(blocks):
    rows = sum(b.shape[0] for b in blocks)
    cols = sum(b.shape[1] for b in blocks)
    out = jnp.zeros((rows, cols), jnp.float32)
    r = c = 0
    for b in blocks:
        out = out.at[r:r + b.shape[0], c:c + b.shape[1]].set(b)
        r += b.shape[0]
        c += b.shape[1]
    return out


def _pad_tile(arr):
    r, c = arr.shape
    rp = -(-r // SUBLANES) * SUBLANES
    return jnp.pad(arr, ((0, rp - r), (0, LANES - c)))


def _pack_everything(params, deg_col, noise):
    """Pack all parameter leaves (+ degree column + noise) into ONE (rows,128) f32 buffer.

    Per decoder level, the three heads' first-layer weights are column-concatenated and
    their second layers are block-diagonal-fused so one MXU matmul serves all heads.
    Returns (buf, layout{name: (row_offset, (rows, cols))}, gnn_nlin, dm_nlin).
    """
    L = len(params['gnn'])
    items = []

    def add(name, arr):
        arr = jnp.asarray(arr, jnp.float32)
        if arr.shape[1] > LANES:
            # TODO(synk): hidden dims > ~42 would need multi-tile columns in the packed buffer.
            raise ValueError(f"packed leaf {name} too wide for one lane tile: {arr.shape}")
        items.append((name, arr))

    gnn_nlin = []
    for l in range(L):
        mlp = params['gnn'][l]['mlp']
        gnn_nlin.append(len(mlp))
        for i, (w, b) in enumerate(mlp):
            add(f'gnn{l}_w{i}', w)
            add(f'gnn{l}_b{i}', b)

    for idx in range(L):
        rs = params['reconstruct_self'][idx]     # [(w,b), (w,b)]
        ds = params['decode_std'][idx]           # [(w,b), (w,b)]
        rd = params['reconstruct_degree'][idx]   # [(w,b), (w,b), (w,b)]
        add(f'head{idx}_w1', jnp.concatenate([rs[0][0], ds[0][0], rd[0][0]], axis=1))  # [d,3d]
        add(f'head{idx}_b1', jnp.concatenate([rs[0][1], ds[0][1], rd[0][1]], axis=1))
        add(f'head{idx}_w2', _block_diag([rs[1][0], ds[1][0], rd[1][0]]))              # [3d,2*out+d]
        add(f'head{idx}_b2', jnp.concatenate([rs[1][1], ds[1][1], rd[1][1]], axis=1))
        add(f'head{idx}_wd3', rd[2][0])
        add(f'head{idx}_bd3', rd[2][1])

    dm_nlin = []
    for j, mlp in enumerate(params['decode_mean']):
        dm_nlin.append(len(mlp))
        for i, (w, b) in enumerate(mlp):
            add(f'dm{j}_w{i}', w)
            add(f'dm{j}_b{i}', b)

    add('deg', deg_col)
    for idx, nz in enumerate(noise):
        add(f'noise{idx}', nz)

    layout = {}
    row = 0
    padded = []
    for name, arr in items:
        layout[name] = (row, tuple(arr.shape))
        p = _pad_tile(arr)
        padded.append(p)
        row += p.shape[0]
    buf = jnp.concatenate(padded, axis=0)
    return buf, layout, tuple(gnn_nlin), tuple(dm_nlin)


def _estimate_cost(params, N, buf_bytes):
    L = len(params['gnn'])
    flops = 0
    in_dim = params['gnn'][0]['mlp'][0][0].shape[0]
    for l in range(L):
        flops += 2 * N * N * in_dim                              # adj @ h
        for (w, _) in params['gnn'][l]['mlp']:
            flops += 2 * N * w.shape[0] * w.shape[1]
        in_dim = params['gnn'][l]['mlp'][-1][0].shape[1]
    transcendentals = 0
    for idx in range(L):
        d = params['reconstruct_self'][idx][0][0].shape[0]
        out = params['reconstruct_self'][idx][-1][0].shape[1]
        flops += 2 * N * d * 3 * d                               # fused head layer 1
        flops += 2 * N * 3 * d * (2 * out + d)                   # block-diag head layer 2
        flops += 2 * N * d * 1                                   # degree head layer 3
        transcendentals += N * out                               # exp(log_std)
    for mlp in params['decode_mean']:
        for (w, _) in mlp:
            flops += 2 * N * w.shape[0] * w.shape[1]
    transcendentals += 64                                        # rsqrt / reciprocal, rough
    bytes_accessed = buf_bytes + 4 * (N * N + N * NUM_FEATURES + N * HIDDEN_DIM[-1] + 1)
    return pl.CostEstimate(flops=flops, transcendentals=transcendentals,
                           bytes_accessed=bytes_accessed)


# ------------------------------ parameter init --------------------------------
def init_linear(key, in_dim, out_dim):
    kw, kb = jax.random.split(key)
    bound = 1.0 / jnp.sqrt(jnp.asarray(in_dim, jnp.float32))
    w = jax.random.uniform(kw, (in_dim, out_dim), jnp.float32, -bound, bound)
    b = jax.random.uniform(kb, (1, out_dim), jnp.float32, -bound, bound)
    return (w, b)


def init_mlp(key, in_dim, hid, out_dim, num_hidden):
    dims = [in_dim] + [hid] * (num_hidden - 1) + [out_dim]
    keys = jax.random.split(key, num_hidden)
    return [init_linear(k, dims[i], dims[i + 1]) for i, k in enumerate(keys)]


def init_params(key, num_features, hidden_dim):
    L = len(hidden_dim)
    keys = iter(jax.random.split(key, 8 * L + 8))
    params = {'gnn': [], 'decode_mean': [], 'decode_std': [],
              'reconstruct_self': [], 'reconstruct_degree': []}
    in_dim = num_features
    for layer in range(L):
        # GIN layer: 2-hidden MLP(input_dim -> hidden -> hidden)
        params['gnn'].append(
            {'mlp': init_mlp(next(keys), in_dim, hidden_dim[layer], hidden_dim[layer], 2)})
        in_dim = hidden_dim[layer]
        out_dim = num_features if layer == L - 1 else hidden_dim[L - layer - 2]
        d = hidden_dim[L - layer - 1]
        if layer > 0:
            params['decode_mean'].append(init_mlp(next(keys), d, d, out_dim, 2))
        params['decode_std'].append(init_mlp(next(keys), d, d, out_dim, 2))
        params['reconstruct_self'].append(init_mlp(next(keys), d, d, out_dim, 2))
        params['reconstruct_degree'].append(init_mlp(next(keys), d, d, 1, 3))
    return params


# -------------------------------- forward pass --------------------------------
@jax.jit
def isoc_vgae_forward(params, adj, h0, degree, key):
    """Returns (loss, h_list[-1]) — mirrors ISOC_VGAE.forward. One pallas_call total."""
    L = len(params['gnn'])
    N = h0.shape[0]
    deg_col = degree.reshape(N, 1).astype(jnp.float32)

    # Gaussian noise per decoder level (jax.random semantics kept); packed into the
    # single parameter buffer so it costs no extra input DMA.
    noise_keys = jax.random.split(key, L)
    noise = []
    for idx in range(L):
        out_dim = params['reconstruct_self'][idx][-1][0].shape[1]
        noise.append(jax.random.normal(noise_keys[idx], (N, out_dim), dtype=jnp.float32))

    buf, layout, gnn_nlin, dm_nlin = _pack_everything(params, deg_col, noise)
    h_out_dim = params['gnn'][L - 1]['mlp'][-1][0].shape[1]

    kernel = functools.partial(
        _fused_forward_kernel,
        layout=layout, num_layers=L, gnn_nlin=gnn_nlin, dm_nlin=dm_nlin,
        gin_eps=GIN_EPS, lambda_self=LAMBDA_SELF,
        lambda_neighbor=LAMBDA_NEIGHBOR, lambda_degree=LAMBDA_DEGREE)

    vmem = pl.BlockSpec(memory_space=pltpu.MemorySpace.VMEM)

    loss_out, h_last = pl.pallas_call(
        kernel,
        out_shape=(jax.ShapeDtypeStruct((1, 1), jnp.float32),
                   jax.ShapeDtypeStruct((N, h_out_dim), jnp.float32)),
        in_specs=[vmem, vmem, vmem],
        out_specs=(vmem, vmem),
        cost_estimate=_estimate_cost(params, N, buf.size * 4),
    )(adj, h0, buf)

    return loss_out[0, 0], h_last


# ------------------------------------ main ------------------------------------
if __name__ == "__main__":
    root = jax.random.PRNGKey(0)
    k_param, k_feat, k_noise = jax.random.split(root, 3)

    # ring graph: each node connected to its two neighbors (no self loops)
    N = NUM_NODES
    idx = jnp.arange(N)
    adj = jnp.zeros((N, N), jnp.float32)
    adj = adj.at[idx, (idx + 1) % N].set(1.0)
    adj = adj.at[idx, (idx - 1) % N].set(1.0)
    degree = jnp.sum(adj, axis=1)                     # [N], float

    h0 = jax.random.normal(k_feat, (N, NUM_FEATURES), dtype=jnp.float32)

    params = init_params(k_param, NUM_FEATURES, HIDDEN_DIM)

    loss, h_last = isoc_vgae_forward(params, adj, h0, degree, k_noise)
    jax.block_until_ready((loss, h_last))

    assert h_last.shape == (N, HIDDEN_DIM[-1])
    assert loss.shape == ()
    assert bool(jnp.isfinite(loss))
    print("KERNEL_OK")
</pallas_src>

<mosaic_0001>
module attributes {stable_mosaic.version = 11 : i64} {
  func.func @_fused_forward_kernel(%arg0: memref<8x8xf32, #tpu.memory_space<vmem>>, %arg1: memref<8x16xf32, #tpu.memory_space<vmem>>, %arg2: memref<520x128xf32, #tpu.memory_space<vmem>>, %arg3: memref<1x1xf32, #tpu.memory_space<vmem>>, %arg4: memref<8x16xf32, #tpu.memory_space<vmem>>) attributes {dimension_semantics = [], scalar_prefetch = 0 : i64, scratch_operands = 0 : i64, tpu.core_type = #tpu.core_type<tc>} {
    %c0 = arith.constant 0 : index
    %c0_0 = arith.constant 0 : index
    %0 = vector.load %arg0[%c0, %c0_0] : memref<8x8xf32, #tpu.memory_space<vmem>>, vector<8x8xf32>
    %c0_1 = arith.constant 0 : index
    %c0_2 = arith.constant 0 : index
    %1 = vector.load %arg1[%c0_1, %c0_2] : memref<8x16xf32, #tpu.memory_space<vmem>>, vector<8x16xf32>
    %c496 = arith.constant 496 : index
    %c0_3 = arith.constant 0 : index
    %2 = vector.load %arg2[%c496, %c0_3] : memref<520x128xf32, #tpu.memory_space<vmem>>, vector<8x1xf32>
    %cst = arith.constant 1.000000e+00 : f32
    %3 = vector.broadcast %cst : f32 to vector<8x1xf32>
    %4 = arith.addf %2, %3 : vector<8x1xf32>
    %5 = tpu.reciprocal %4 {approx = true} : vector<8x1xf32> -> vector<8x1xf32>
    %cst_4 = arith.constant 1.000000e+00 : f32
    %6 = vector.broadcast %cst_4 : f32 to vector<8x16xf32>
    %7 = arith.mulf %6, %1 : vector<8x16xf32>
    %cst_5 = arith.constant dense<0.000000e+00> : vector<8x16xf32>
    %8 = tpu.matmul %0, %1, %cst_5 {dimension_numbers = #tpu.dot_dimension_numbers<[1], [0], [0], [1], [0, 0, 1, 1], [], []>} : vector<8x8xf32>, vector<8x16xf32>, vector<8x16xf32> -> vector<8x16xf32>
    %9 = arith.addf %7, %8 : vector<8x16xf32>
    %c0_6 = arith.constant 0 : index
    %c0_7 = arith.constant 0 : index
    %10 = vector.load %arg2[%c0_6, %c0_7] : memref<520x128xf32, #tpu.memory_space<vmem>>, vector<16x32xf32>
    %cst_8 = arith.constant dense<0.000000e+00> : vector<8x32xf32>
    %11 = tpu.matmul %9, %10, %cst_8 {dimension_numbers = #tpu.dot_dimension_numbers<[1], [0], [0], [1], [0, 0, 1, 1], [], []>} : vector<8x16xf32>, vector<16x32xf32>, vector<8x32xf32> -> vector<8x32xf32>
    %c16 = arith.constant 16 : index
    %c0_9 = arith.constant 0 : index
    %12 = vector.load %arg2[%c16, %c0_9] : memref<520x128xf32, #tpu.memory_space<vmem>>, vector<1x32xf32>
    %13 = vector.broadcast %12 : vector<1x32xf32> to vector<8x32xf32>
    %14 = arith.addf %11, %13 : vector<8x32xf32>
    %cst_10 = arith.constant 0.000000e+00 : f32
    %15 = vector.broadcast %cst_10 : f32 to vector<8x32xf32>
    %16 = arith.maximumf %14, %15 : vector<8x32xf32>
    %c24 = arith.constant 24 : index
    %c0_11 = arith.constant 0 : index
    %17 = vector.load %arg2[%c24, %c0_11] : memref<520x128xf32, #tpu.memory_space<vmem>>, vector<32x32xf32>
    %cst_12 = arith.constant dense<0.000000e+00> : vector<8x32xf32>
    %18 = tpu.matmul %16, %17, %cst_12 {dimension_numbers = #tpu.dot_dimension_numbers<[1], [0], [0], [1], [0, 0, 1, 1], [], []>} : vector<8x32xf32>, vector<32x32xf32>, vector<8x32xf32> -> vector<8x32xf32>
    %c56 = arith.constant 56 : index
    %c0_13 = arith.constant 0 : index
    %19 = vector.load %arg2[%c56, %c0_13] : memref<520x128xf32, #tpu.memory_space<vmem>>, vector<1x32xf32>
    %20 = vector.broadcast %19 : vector<1x32xf32> to vector<8x32xf32>
    %21 = arith.addf %18, %20 : vector<8x32xf32>
    %cst_14 = arith.constant dense<0.000000e+00> : vector<32xf32>
    %22 = vector.multi_reduction <add>, %21, %cst_14 [0] : vector<8x32xf32> to vector<32xf32>
    %23 = vector.shape_cast %22 : vector<32xf32> to vector<1x32xf32>
    %cst_15 = arith.constant 8.000000e+00 : f32
    %24 = vector.broadcast %cst_15 : f32 to vector<1x32xf32>
    %25 = arith.divf %23, %24 : vector<1x32xf32>
    %26 = vector.broadcast %25 : vector<1x32xf32> to vector<8x32xf32>
    %27 = arith.subf %21, %26 : vector<8x32xf32>
    %28 = arith.mulf %27, %27 : vector<8x32xf32>
    %cst_16 = arith.constant dense<0.000000e+00> : vector<32xf32>
    %29 = vector.multi_reduction <add>, %28, %cst_16 [0] : vector<8x32xf32> to vector<32xf32>
    %30 = vector.shape_cast %29 : vector<32xf32> to vector<1x32xf32>
    %cst_17 = arith.constant 8.000000e+00 : f32
    %31 = vector.broadcast %cst_17 : f32 to vector<1x32xf32>
    %32 = arith.divf %30, %31 : vector<1x32xf32>
    %33 = vector.broadcast %25 : vector<1x32xf32> to vector<8x32xf32>
    %34 = arith.subf %21, %33 : vector<8x32xf32>
    %cst_18 = arith.constant 9.99999974E-6 : f32
    %35 = vector.broadcast %cst_18 : f32 to vector<1x32xf32>
    %36 = arith.addf %32, %35 : vector<1x32xf32>
    %37 = math.rsqrt %36 : vector<1x32xf32>
    %38 = vector.broadcast %37 : vector<1x32xf32> to vector<8x32xf32>
    %39 = arith.mulf %34, %38 : vector<8x32xf32>
    %cst_19 = arith.constant 0.000000e+00 : f32
    %40 = vector.broadcast %cst_19 : f32 to vector<8x32xf32>
    %41 = arith.maximumf %39, %40 : vector<8x32xf32>
    %cst_20 = arith.constant 1.000000e+00 : f32
    %42 = vector.broadcast %cst_20 : f32 to vector<8x32xf32>
    %43 = arith.mulf %42, %41 : vector<8x32xf32>
    %cst_21 = arith.constant dense<0.000000e+00> : vector<8x32xf32>
    %44 = tpu.matmul %0, %41, %cst_21 {dimension_numbers = #tpu.dot_dimension_numbers<[1], [0], [0], [1], [0, 0, 1, 1], [], []>} : vector<8x8xf32>, vector<8x32xf32>, vector<8x32xf32> -> vector<8x32xf32>
    %45 = arith.addf %43, %44 : vector<8x32xf32>
    %c64 = arith.constant 64 : index
    %c0_22 = arith.constant 0 : index
    %46 = vector.load %arg2[%c64, %c0_22] : memref<520x128xf32, #tpu.memory_space<vmem>>, vector<32x16xf32>
    %cst_23 = arith.constant dense<0.000000e+00> : vector<8x16xf32>
    %47 = tpu.matmul %45, %46, %cst_23 {dimension_numbers = #tpu.dot_dimension_numbers<[1], [0], [0], [1], [0, 0, 1, 1], [], []>} : vector<8x32xf32>, vector<32x16xf32>, vector<8x16xf32> -> vector<8x16xf32>
    %c96 = arith.constant 96 : index
    %c0_24 = arith.constant 0 : index
    %48 = vector.load %arg2[%c96, %c0_24] : memref<520x128xf32, #tpu.memory_space<vmem>>, vector<1x16xf32>
    %49 = vector.broadcast %48 : vector<1x16xf32> to vector<8x16xf32>
    %50 = arith.addf %47, %49 : vector<8x16xf32>
    %cst_25 = arith.constant 0.000000e+00 : f32
    %51 = vector.broadcast %cst_25 : f32 to vector<8x16xf32>
    %52 = arith.maximumf %50, %51 : vector<8x16xf32>
    %c104 = arith.constant 104 : index
    %c0_26 = arith.constant 0 : index
    %53 = vector.load %arg2[%c104, %c0_26] : memref<520x128xf32, #tpu.memory_space<vmem>>, vector<16x16xf32>
    %cst_27 = arith.constant dense<0.000000e+00> : vector<8x16xf32>
    %54 = tpu.matmul %52, %53, %cst_27 {dimension_numbers = #tpu.dot_dimension_numbers<[1], [0], [0], [1], [0, 0, 1, 1], [], []>} : vector<8x16xf32>, vector<16x16xf32>, vector<8x16xf32> -> vector<8x16xf32>
    %c120 = arith.constant 120 : index
    %c0_28 = arith.constant 0 : index
    %55 = vector.load %arg2[%c120, %c0_28] : memref<520x128xf32, #tpu.memory_space<vmem>>, vector<1x16xf32>
    %56 = vector.broadcast %55 : vector<1x16xf32> to vector<8x16xf32>
    %57 = arith.addf %54, %56 : vector<8x16xf32>
    %cst_29 = arith.constant 0.000000e+00 : f32
    %58 = vector.broadcast %cst_29 : f32 to vector<1x1xf32>
    %cst_30 = arith.constant 0.000000e+00 : f32
    %59 = vector.broadcast %cst_30 : f32 to vector<1x1xf32>
    %cst_31 = arith.constant 0.000000e+00 : f32
    %60 = vector.broadcast %cst_31 : f32 to vector<1x1xf32>
    %c128 = arith.constant 128 : index
    %c0_32 = arith.constant 0 : index
    %61 = vector.load %arg2[%c128, %c0_32] : memref<520x128xf32, #tpu.memory_space<vmem>>, vector<16x48xf32>
    %cst_33 = arith.constant dense<0.000000e+00> : vector<8x48xf32>
    %62 = tpu.matmul %57, %61, %cst_33 {dimension_numbers = #tpu.dot_dimension_numbers<[1], [0], [0], [1], [0, 0, 1, 1], [], []>} : vector<8x16xf32>, vector<16x48xf32>, vector<8x48xf32> -> vector<8x48xf32>
    %c144 = arith.constant 144 : index
    %c0_34 = arith.constant 0 : index
    %63 = vector.load %arg2[%c144, %c0_34] : memref<520x128xf32, #tpu.memory_space<vmem>>, vector<1x48xf32>
    %64 = vector.broadcast %63 : vector<1x48xf32> to vector<8x48xf32>
    %65 = arith.addf %62, %64 : vector<8x48xf32>
    %cst_35 = arith.constant 0.000000e+00 : f32
    %66 = vector.broadcast %cst_35 : f32 to vector<8x48xf32>
    %67 = arith.maximumf %65, %66 : vector<8x48xf32>
    %c152 = arith.constant 152 : index
    %c0_36 = arith.constant 0 : index
    %68 = vector.load %arg2[%c152, %c0_36] : memref<520x128xf32, #tpu.memory_space<vmem>>, vector<48x80xf32>
    %cst_37 = arith.constant dense<0.000000e+00> : vector<8x80xf32>
    %69 = tpu.matmul %67, %68, %cst_37 {dimension_numbers = #tpu.dot_dimension_numbers<[1], [0], [0], [1], [0, 0, 1, 1], [], []>} : vector<8x48xf32>, vector<48x80xf32>, vector<8x80xf32> -> vector<8x80xf32>
    %c200 = arith.constant 200 : index
    %c0_38 = arith.constant 0 : index
    %70 = vector.load %arg2[%c200, %c0_38] : memref<520x128xf32, #tpu.memory_space<vmem>>, vector<1x80xf32>
    %71 = vector.broadcast %70 : vector<1x80xf32> to vector<8x80xf32>
    %72 = arith.addf %69, %71 : vector<8x80xf32>
    %73 = vector.extract_strided_slice %72 {offsets = [0, 0], sizes = [8, 32], strides = [1, 1]} : vector<8x80xf32> to vector<8x32xf32>
    %74 = vector.extract_strided_slice %72 {offsets = [0, 32], sizes = [8, 32], strides = [1, 1]} : vector<8x80xf32> to vector<8x32xf32>
    %75 = vector.extract_strided_slice %72 {offsets = [0, 64], sizes = [8, 16], strides = [1, 1]} : vector<8x80xf32> to vector<8x16xf32>
    %cst_39 = arith.constant 0.000000e+00 : f32
    %76 = vector.broadcast %cst_39 : f32 to vector<8x16xf32>
    %77 = arith.maximumf %75, %76 : vector<8x16xf32>
    %c208 = arith.constant 208 : index
    %c0_40 = arith.constant 0 : index
    %78 = vector.load %arg2[%c208, %c0_40] : memref<520x128xf32, #tpu.memory_space<vmem>>, vector<16x1xf32>
    %cst_41 = arith.constant dense<0.000000e+00> : vector<8x1xf32>
    %79 = tpu.matmul %77, %78, %cst_41 {dimension_numbers = #tpu.dot_dimension_numbers<[1], [0], [0], [1], [0, 0, 1, 1], [], []>} : vector<8x16xf32>, vector<16x1xf32>, vector<8x1xf32> -> vector<8x1xf32>
    %c224 = arith.constant 224 : index
    %c0_42 = arith.constant 0 : index
    %80 = vector.load %arg2[%c224, %c0_42] : memref<520x128xf32, #tpu.memory_space<vmem>>, vector<1x1xf32>
    %81 = vector.broadcast %80 : vector<1x1xf32> to vector<8x1xf32>
    %82 = arith.addf %79, %81 : vector<8x1xf32>
    %cst_43 = arith.constant 0.000000e+00 : f32
    %83 = vector.broadcast %cst_43 : f32 to vector<8x1xf32>
    %84 = arith.maximumf %82, %83 : vector<8x1xf32>
    %85 = math.exp %74 : vector<8x32xf32>
    %c504 = arith.constant 504 : index
    %c0_44 = arith.constant 0 : index
    %86 = vector.load %arg2[%c504, %c0_44] : memref<520x128xf32, #tpu.memory_space<vmem>>, vector<8x32xf32>
    %87 = arith.mulf %86, %85 : vector<8x32xf32>
    %88 = arith.addf %73, %87 : vector<8x32xf32>
    %89 = arith.subf %41, %88 : vector<8x32xf32>
    %90 = arith.mulf %89, %89 : vector<8x32xf32>
    %cst_45 = arith.constant dense<0.000000e+00> : vector<8xf32>
    %91 = vector.multi_reduction <add>, %90, %cst_45 [1] : vector<8x32xf32> to vector<8xf32>
    %92 = vector.shape_cast %91 : vector<8xf32> to vector<8x1xf32>
    %cst_46 = arith.constant dense<0.000000e+00> : vector<1xf32>
    %93 = vector.multi_reduction <add>, %92, %cst_46 [0] : vector<8x1xf32> to vector<1xf32>
    %94 = vector.shape_cast %93 : vector<1xf32> to vector<1x1xf32>
    %cst_47 = arith.constant 3.906250e-03 : f32
    %95 = vector.broadcast %cst_47 : f32 to vector<1x1xf32>
    %96 = arith.mulf %94, %95 : vector<1x1xf32>
    %97 = arith.addf %58, %96 : vector<1x1xf32>
    %98 = vector.broadcast %5 : vector<8x1xf32> to vector<8x32xf32>
    %99 = arith.mulf %45, %98 : vector<8x32xf32>
    %100 = arith.subf %73, %99 : vector<8x32xf32>
    %cst_48 = arith.constant 2.000000e+00 : f32
    %101 = vector.broadcast %cst_48 : f32 to vector<8x32xf32>
    %102 = arith.mulf %101, %74 : vector<8x32xf32>
    %cst_49 = arith.constant -1.000000e+00 : f32
    %103 = vector.broadcast %cst_49 : f32 to vector<8x32xf32>
    %104 = arith.subf %103, %102 : vector<8x32xf32>
    %105 = arith.mulf %100, %100 : vector<8x32xf32>
    %106 = arith.addf %104, %105 : vector<8x32xf32>
    %107 = arith.mulf %85, %85 : vector<8x32xf32>
    %108 = arith.addf %106, %107 : vector<8x32xf32>
    %cst_50 = arith.constant dense<0.000000e+00> : vector<8xf32>
    %109 = vector.multi_reduction <add>, %108, %cst_50 [1] : vector<8x32xf32> to vector<8xf32>
    %110 = vector.shape_cast %109 : vector<8xf32> to vector<8x1xf32>
    %cst_51 = arith.constant dense<0.000000e+00> : vector<1xf32>
    %111 = vector.multi_reduction <add>, %110, %cst_51 [0] : vector<8x1xf32> to vector<1xf32>
    %112 = vector.shape_cast %111 : vector<1xf32> to vector<1x1xf32>
    %cst_52 = arith.constant 3.906250e-03 : f32
    %113 = vector.broadcast %cst_52 : f32 to vector<1x1xf32>
    %114 = arith.mulf %112, %113 : vector<1x1xf32>
    %cst_53 = arith.constant 5.000000e-01 : f32
    %115 = vector.broadcast %cst_53 : f32 to vector<1x1xf32>
    %116 = arith.mulf %115, %114 : vector<1x1xf32>
    %117 = arith.addf %59, %116 : vector<1x1xf32>
    %118 = arith.subf %84, %2 : vector<8x1xf32>
    %119 = arith.mulf %118, %118 : vector<8x1xf32>
    %cst_54 = arith.constant dense<0.000000e+00> : vector<8xf32>
    %120 = vector.multi_reduction <add>, %119, %cst_54 [1] : vector<8x1xf32> to vector<8xf32>
    %121 = vector.shape_cast %120 : vector<8xf32> to vector<8x1xf32>
    %cst_55 = arith.constant dense<0.000000e+00> : vector<1xf32>
    %122 = vector.multi_reduction <add>, %121, %cst_55 [0] : vector<8x1xf32> to vector<1xf32>
    %123 = vector.shape_cast %122 : vector<1xf32> to vector<1x1xf32>
    %cst_56 = arith.constant 1.250000e-01 : f32
    %124 = vector.broadcast %cst_56 : f32 to vector<1x1xf32>
    %125 = arith.mulf %123, %124 : vector<1x1xf32>
    %126 = arith.addf %60, %125 : vector<1x1xf32>
    %c232 = arith.constant 232 : index
    %c0_57 = arith.constant 0 : index
    %127 = vector.load %arg2[%c232, %c0_57] : memref<520x128xf32, #tpu.memory_space<vmem>>, vector<32x96xf32>
    %cst_58 = arith.constant dense<0.000000e+00> : vector<8x96xf32>
    %128 = tpu.matmul %41, %127, %cst_58 {dimension_numbers = #tpu.dot_dimension_numbers<[1], [0], [0], [1], [0, 0, 1, 1], [], []>} : vector<8x32xf32>, vector<32x96xf32>, vector<8x96xf32> -> vector<8x96xf32>
    %c264 = arith.constant 264 : index
    %c0_59 = arith.constant 0 : index
    %129 = vector.load %arg2[%c264, %c0_59] : memref<520x128xf32, #tpu.memory_space<vmem>>, vector<1x96xf32>
    %130 = vector.broadcast %129 : vector<1x96xf32> to vector<8x96xf32>
    %131 = arith.addf %128, %130 : vector<8x96xf32>
    %cst_60 = arith.constant 0.000000e+00 : f32
    %132 = vector.broadcast %cst_60 : f32 to vector<8x96xf32>
    %133 = arith.maximumf %131, %132 : vector<8x96xf32>
    %c272 = arith.constant 272 : index
    %c0_61 = arith.constant 0 : index
    %134 = vector.load %arg2[%c272, %c0_61] : memref<520x128xf32, #tpu.memory_space<vmem>>, vector<96x64xf32>
    %cst_62 = arith.constant dense<0.000000e+00> : vector<8x64xf32>
    %135 = tpu.matmul %133, %134, %cst_62 {dimension_numbers = #tpu.dot_dimension_numbers<[1], [0], [0], [1], [0, 0, 1, 1], [], []>} : vector<8x96xf32>, vector<96x64xf32>, vector<8x64xf32> -> vector<8x64xf32>
    %c368 = arith.constant 368 : index
    %c0_63 = arith.constant 0 : index
    %136 = vector.load %arg2[%c368, %c0_63] : memref<520x128xf32, #tpu.memory_space<vmem>>, vector<1x64xf32>
    %137 = vector.broadcast %136 : vector<1x64xf32> to vector<8x64xf32>
    %138 = arith.addf %135, %137 : vector<8x64xf32>
    %139 = vector.extract_strided_slice %138 {offsets = [0, 0], sizes = [8, 16], strides = [1, 1]} : vector<8x64xf32> to vector<8x16xf32>
    %140 = vector.extract_strided_slice %138 {offsets = [0, 16], sizes = [8, 16], strides = [1, 1]} : vector<8x64xf32> to vector<8x16xf32>
    %141 = vector.extract_strided_slice %138 {offsets = [0, 32], sizes = [8, 32], strides = [1, 1]} : vector<8x64xf32> to vector<8x32xf32>
    %cst_64 = arith.constant 0.000000e+00 : f32
    %142 = vector.broadcast %cst_64 : f32 to vector<8x32xf32>
    %143 = arith.maximumf %141, %142 : vector<8x32xf32>
    %c376 = arith.constant 376 : index
    %c0_65 = arith.constant 0 : index
    %144 = vector.load %arg2[%c376, %c0_65] : memref<520x128xf32, #tpu.memory_space<vmem>>, vector<32x1xf32>
    %cst_66 = arith.constant dense<0.000000e+00> : vector<8x1xf32>
    %145 = tpu.matmul %143, %144, %cst_66 {dimension_numbers = #tpu.dot_dimension_numbers<[1], [0], [0], [1], [0, 0, 1, 1], [], []>} : vector<8x32xf32>, vector<32x1xf32>, vector<8x1xf32> -> vector<8x1xf32>
    %c408 = arith.constant 408 : index
    %c0_67 = arith.constant 0 : index
    %146 = vector.load %arg2[%c408, %c0_67] : memref<520x128xf32, #tpu.memory_space<vmem>>, vector<1x1xf32>
    %147 = vector.broadcast %146 : vector<1x1xf32> to vector<8x1xf32>
    %148 = arith.addf %145, %147 : vector<8x1xf32>
    %cst_68 = arith.constant 0.000000e+00 : f32
    %149 = vector.broadcast %cst_68 : f32 to vector<8x1xf32>
    %150 = arith.maximumf %148, %149 : vector<8x1xf32>
    %c416 = arith.constant 416 : index
    %c0_69 = arith.constant 0 : index
    %151 = vector.load %arg2[%c416, %c0_69] : memref<520x128xf32, #tpu.memory_space<vmem>>, vector<32x32xf32>
    %cst_70 = arith.constant dense<0.000000e+00> : vector<8x32xf32>
    %152 = tpu.matmul %88, %151, %cst_70 {dimension_numbers = #tpu.dot_dimension_numbers<[1], [0], [0], [1], [0, 0, 1, 1], [], []>} : vector<8x32xf32>, vector<32x32xf32>, vector<8x32xf32> -> vector<8x32xf32>
    %c448 = arith.constant 448 : index
    %c0_71 = arith.constant 0 : index
    %153 = vector.load %arg2[%c448, %c0_71] : memref<520x128xf32, #tpu.memory_space<vmem>>, vector<1x32xf32>
    %154 = vector.broadcast %153 : vector<1x32xf32> to vector<8x32xf32>
    %155 = arith.addf %152, %154 : vector<8x32xf32>
    %cst_72 = arith.constant 0.000000e+00 : f32
    %156 = vector.broadcast %cst_72 : f32 to vector<8x32xf32>
    %157 = arith.maximumf %155, %156 : vector<8x32xf32>
    %c456 = arith.constant 456 : index
    %c0_73 = arith.constant 0 : index
    %158 = vector.load %arg2[%c456, %c0_73] : memref<520x128xf32, #tpu.memory_space<vmem>>, vector<32x16xf32>
    %cst_74 = arith.constant dense<0.000000e+00> : vector<8x16xf32>
    %159 = tpu.matmul %157, %158, %cst_74 {dimension_numbers = #tpu.dot_dimension_numbers<[1], [0], [0], [1], [0, 0, 1, 1], [], []>} : vector<8x32xf32>, vector<32x16xf32>, vector<8x16xf32> -> vector<8x16xf32>
    %c488 = arith.constant 488 : index
    %c0_75 = arith.constant 0 : index
    %160 = vector.load %arg2[%c488, %c0_75] : memref<520x128xf32, #tpu.memory_space<vmem>>, vector<1x16xf32>
    %161 = vector.broadcast %160 : vector<1x16xf32> to vector<8x16xf32>
    %162 = arith.addf %159, %161 : vector<8x16xf32>
    %163 = arith.addf %139, %162 : vector<8x16xf32>
    %164 = math.exp %140 : vector<8x16xf32>
    %c512 = arith.constant 512 : index
    %c0_76 = arith.constant 0 : index
    %165 = vector.load %arg2[%c512, %c0_76] : memref<520x128xf32, #tpu.memory_space<vmem>>, vector<8x16xf32>
    %166 = arith.mulf %165, %164 : vector<8x16xf32>
    %167 = arith.addf %163, %166 : vector<8x16xf32>
    %168 = arith.subf %1, %167 : vector<8x16xf32>
    %169 = arith.mulf %168, %168 : vector<8x16xf32>
    %cst_77 = arith.constant dense<0.000000e+00> : vector<8xf32>
    %170 = vector.multi_reduction <add>, %169, %cst_77 [1] : vector<8x16xf32> to vector<8xf32>
    %171 = vector.shape_cast %170 : vector<8xf32> to vector<8x1xf32>
    %cst_78 = arith.constant dense<0.000000e+00> : vector<1xf32>
    %172 = vector.multi_reduction <add>, %171, %cst_78 [0] : vector<8x1xf32> to vector<1xf32>
    %173 = vector.shape_cast %172 : vector<1xf32> to vector<1x1xf32>
    %cst_79 = arith.constant 7.812500e-03 : f32
    %174 = vector.broadcast %cst_79 : f32 to vector<1x1xf32>
    %175 = arith.mulf %173, %174 : vector<1x1xf32>
    %176 = arith.addf %97, %175 : vector<1x1xf32>
    %177 = vector.broadcast %5 : vector<8x1xf32> to vector<8x16xf32>
    %178 = arith.mulf %9, %177 : vector<8x16xf32>
    %179 = arith.subf %163, %178 : vector<8x16xf32>
    %cst_80 = arith.constant 2.000000e+00 : f32
    %180 = vector.broadcast %cst_80 : f32 to vector<8x16xf32>
    %181 = arith.mulf %180, %140 : vector<8x16xf32>
    %cst_81 = arith.constant -1.000000e+00 : f32
    %182 = vector.broadcast %cst_81 : f32 to vector<8x16xf32>
    %183 = arith.subf %182, %181 : vector<8x16xf32>
    %184 = arith.mulf %179, %179 : vector<8x16xf32>
    %185 = arith.addf %183, %184 : vector<8x16xf32>
    %186 = arith.mulf %164, %164 : vector<8x16xf32>
    %187 = arith.addf %185, %186 : vector<8x16xf32>
    %cst_82 = arith.constant dense<0.000000e+00> : vector<8xf32>
    %188 = vector.multi_reduction <add>, %187, %cst_82 [1] : vector<8x16xf32> to vector<8xf32>
    %189 = vector.shape_cast %188 : vector<8xf32> to vector<8x1xf32>
    %cst_83 = arith.constant dense<0.000000e+00> : vector<1xf32>
    %190 = vector.multi_reduction <add>, %189, %cst_83 [0] : vector<8x1xf32> to vector<1xf32>
    %191 = vector.shape_cast %190 : vector<1xf32> to vector<1x1xf32>
    %cst_84 = arith.constant 7.812500e-03 : f32
    %192 = vector.broadcast %cst_84 : f32 to vector<1x1xf32>
    %193 = arith.mulf %191, %192 : vector<1x1xf32>
    %cst_85 = arith.constant 5.000000e-01 : f32
    %194 = vector.broadcast %cst_85 : f32 to vector<1x1xf32>
    %195 = arith.mulf %194, %193 : vector<1x1xf32>
    %196 = arith.addf %117, %195 : vector<1x1xf32>
    %197 = arith.subf %150, %2 : vector<8x1xf32>
    %198 = arith.mulf %197, %197 : vector<8x1xf32>
    %cst_86 = arith.constant dense<0.000000e+00> : vector<8xf32>
    %199 = vector.multi_reduction <add>, %198, %cst_86 [1] : vector<8x1xf32> to vector<8xf32>
    %200 = vector.shape_cast %199 : vector<8xf32> to vector<8x1xf32>
    %cst_87 = arith.constant dense<0.000000e+00> : vector<1xf32>
    %201 = vector.multi_reduction <add>, %200, %cst_87 [0] : vector<8x1xf32> to vector<1xf32>
    %202 = vector.shape_cast %201 : vector<1xf32> to vector<1x1xf32>
    %cst_88 = arith.constant 1.250000e-01 : f32
    %203 = vector.broadcast %cst_88 : f32 to vector<1x1xf32>
    %204 = arith.mulf %202, %203 : vector<1x1xf32>
    %205 = arith.addf %126, %204 : vector<1x1xf32>
    %cst_89 = arith.constant 1.000000e+00 : f32
    %206 = vector.broadcast %cst_89 : f32 to vector<1x1xf32>
    %207 = arith.mulf %206, %176 : vector<1x1xf32>
    %cst_90 = arith.constant 9.99999974E-5 : f32
    %208 = vector.broadcast %cst_90 : f32 to vector<1x1xf32>
    %209 = arith.mulf %208, %196 : vector<1x1xf32>
    %210 = arith.addf %207, %209 : vector<1x1xf32>
    %cst_91 = arith.constant 1.000000e+01 : f32
    %211 = vector.broadcast %cst_91 : f32 to vector<1x1xf32>
    %212 = arith.mulf %211, %205 : vector<1x1xf32>
    %213 = arith.addf %210, %212 : vector<1x1xf32>
    %cst_92 = arith.constant 5.000000e-01 : f32
    %214 = vector.broadcast %cst_92 : f32 to vector<1x1xf32>
    %215 = arith.mulf %213, %214 : vector<1x1xf32>
    %c0_93 = arith.constant 0 : index
    %c0_94 = arith.constant 0 : index
    %216 = vector.load %arg3[%c0_93, %c0_94] : memref<1x1xf32, #tpu.memory_space<vmem>>, vector<1x1xf32>
    tpu.vector_store %arg3[%c0_93, %c0_94], %215 {strides = array<i32>} : memref<1x1xf32, #tpu.memory_space<vmem>>, vector<1x1xf32>,
    %c0_95 = arith.constant 0 : index
    %c0_96 = arith.constant 0 : index
    %217 = vector.load %arg4[%c0_95, %c0_96] : memref<8x16xf32, #tpu.memory_space<vmem>>, vector<8x16xf32>
    tpu.vector_store %arg4[%c0_95, %c0_96], %57 {strides = array<i32>} : memref<8x16xf32, #tpu.memory_space<vmem>>, vector<8x16xf32>,
    return
  }
}

</mosaic_0001>

<llo_original>
// kernel: isoc_vgae_forward.3
$region0: #{isoc_vgae_forward.3}
  #allocation0 [shape = 'u32[]', space=smem, size = 0x4, offset = 0x4, fixed_abs, tag = 'smem constant byte address 0x4 - core index']
  #allocation1 [shape = 'u32[144,128]{1,0:T(1,128)}', space=vmem, size = 0x12000, scoped, tag = 'internal scratch']
  %s0 = inlined_call_operand.vmem [shape: f32[8,8], index: 0, kind: input, shape index: {}]
  %s1 = inlined_call_operand.vmem [shape: f32[8,16], index: 1, kind: input, shape index: {}]
  %s2 = inlined_call_operand.vmem [shape: f32[520,128], index: 2, kind: input, shape index: {}]
  %s3 = inlined_call_operand.hbm [shape: f32[1,1], index: 3, kind: output, shape index: {0}]
  %s4 = inlined_call_operand.hbm [shape: f32[8,16], index: 4, kind: output, shape index: {1}]
  %5 = xla_tuple %s3, %s4
  %s6 = sld [smem:[#allocation0]]
  $region30: #{isoc_vgae_forward.3} parent=0
    _
  %s8 = ssub.s32 1, %s6
  %s9 = scalar_select 0, %s8, %s6
  $region1: #{isoc_vgae_forward.3} parent=0
    #allocation2 [shape = 'u8[512]{0}', space=vmem, size = 0x400, scoped, tag = 'output window, operand 0, single buffered']
    #allocation3 [shape = 's32[1]{0}', space=sflag, size = 0x4, scoped, tag = 'scoped memory for isoc_vgae_forward.3']
    #allocation4 [shape = 'u8[4096]{0}', space=vmem, size = 0x1000, scoped, tag = 'output window, operand 1, single buffered']
    #allocation5 [shape = 's32[1]{0}', space=sflag, size = 0x4, scoped, tag = 'scoped memory for isoc_vgae_forward.3']
    %10 = vsyncpa [#allocation3], 0
    %11 = vsyncpa [#allocation5], 0
    // Predicated region
    $region2: #{isoc_vgae_forward.3} parent=1 // pred_check
      _
    $region3: #{isoc_vgae_forward.3} parent=1 // pred_check_branch
      %13 = sbr.rel (0) target = $region5
    $region4: #{isoc_vgae_forward.3} parent=1 // pred_region
      _
    $region5: #{isoc_vgae_forward.3} parent=1 // pred_fallthru
      _
    // Predicated region
    $region6: #{isoc_vgae_forward.3} parent=1 // pred_check
      _
    $region7: #{isoc_vgae_forward.3} parent=1 // pred_check_branch
      %15 = sbr.rel (0) target = $region9
    $region8: #{isoc_vgae_forward.3} parent=1 // pred_region
      _
    $region9: #{isoc_vgae_forward.3} parent=1 // pred_fallthru
      _
    // Predicated region
    $region10: #{isoc_vgae_forward.3} parent=1 // pred_check
      _
    $region11: #{isoc_vgae_forward.3} parent=1 // pred_check_branch
      %17 = sbr.rel (0) target = $region13
    $region12: #{isoc_vgae_forward.3} parent=1 // pred_region
      _
    $region13: #{isoc_vgae_forward.3} parent=1 // pred_fallthru
      _
    %v18 = vld [vmem:[%s0] sm:$0xff]
    %v19 = vld [vmem:[%s1] sm:$0xff]
    %v20 = vld [vmem:[%s2 + $0x1f0] sm:$0xff]
    %v21 = vadd.f32 %v20, 1.0
    %v22 = vrcp.pop %v21
    %vm23 = vcmask 64512
    %v25 = vsel %vm23, %v18, 0
    %27 = vmatprep.subr.mxu0 0.0
    %28 = vmatpush1.msra.mxu0 %v19
    %29 = vmatprep.subr.mxu0 0.0
    %30 = vmatpush1.msra.mxu0 0.0
    %31 = vmatprep.subr.mxu0 0.0
    %32 = vmatpush1.msra.mxu0 0.0
    %33 = vmatprep.subr.mxu0 0.0
    %34 = vmatpush1.msra.mxu0 0.0
    %35 = vmatprep.subr.mxu0 0.0
    %36 = vmatpush1.msra.mxu0 0.0
    %37 = vmatprep.subr.mxu0 0.0
    %38 = vmatpush1.msra.mxu0 0.0
    %39 = vmatprep.subr.mxu0 0.0
    %40 = vmatpush1.msra.mxu0 0.0
    %41 = vmatprep.subr.mxu0 0.0
    %42 = vmatpush1.msra.mxu0 0.0
    %43 = vmatprep.subr.mxu0 0.0
    %44 = vmatpush1.msra.mxu0 0.0
    %45 = vmatprep.subr.mxu0 0.0
    %46 = vmatpush1.msra.mxu0 0.0
    %47 = vmatprep.subr.mxu0 0.0
    %48 = vmatpush1.msra.mxu0 0.0
    %49 = vmatprep.subr.mxu0 0.0
    %50 = vmatpush1.msra.mxu0 0.0
    %51 = vmatprep.subr.mxu0 0.0
    %52 = vmatpush1.msra.mxu0 0.0
    %53 = vmatprep.subr.mxu0 0.0
    %54 = vmatpush1.msra.mxu0 0.0
    %55 = vmatprep.subr.mxu0 0.0
    %56 = vmatpush1.msra.mxu0 0.0
    %57 = vmatprep.subr.mxu0 0.0
    %58 = vmatpush1.msra.mxu0 0.0
    %59 = vmatprep.subr.mxu0 0.0
    %60 = vmatpush1.msra.mxu0 0.0
    %61 = vmatprep.subr.mxu0 0.0
    %62 = vmatpush1.msra.mxu0 0.0
    %63 = vmatprep.subr.mxu0 0.0
    %64 = vmatpush1.msra.mxu0 0.0
    %65 = vmatprep.subr.mxu0 0.0
    %66 = vmatpush1.msra.mxu0 0.0
    %67 = vmatprep.subr.mxu0 0.0
    %68 = vmatpush1.msra.mxu0 0.0
    %69 = vmatprep.subr.mxu0 0.0
    %70 = vmatpush1.msra.mxu0 0.0
    %71 = vmatprep.subr.mxu0 0.0
    %72 = vmatpush1.msra.mxu0 0.0
    %73 = vmatprep.subr.mxu0 0.0
    %74 = vmatpush1.msra.mxu0 0.0
    %75 = vmatprep.subr.mxu0 0.0
    %76 = vmatpush1.msra.mxu0 0.0
    %77 = vmatprep.subr.mxu0 0.0
    %78 = vmatpush1.msra.mxu0 0.0
    %79 = vmatprep.subr.mxu0 0.0
    %80 = vmatpush1.msra.mxu0 0.0
    %81 = vmatprep.subr.mxu0 0.0
    %82 = vmatpush1.msra.mxu0 0.0
    %83 = vmatprep.subr.mxu0 0.0
    %84 = vmatpush1.msra.mxu0 0.0
    %85 = vmatprep.subr.mxu0 0.0
    %86 = vmatpush1.msra.mxu0 0.0
    %87 = vmatprep.subr.mxu0 0.0
    %88 = vmatpush1.msra.mxu0 0.0
    %89 = vmatprep.subr.mxu0 0.0
    %90 = vmatpush1.msra.mxu0 0.0
    %91 = vmatprep.mubr.f32.mxu0 0.0
    %92 = vmatmul.mubr.f32.gmra.mrb[0].mxu0 %v25
    %v93 = vpop.f32.mrb[0].mxu0
    %v94 = vadd.f32 0.0, %v93
    %v95 = vpop.f32.mrb[0].mxu0
    %96 = vdwg.mxu0
    %v97 = vadd.f32 %v19, %v94
    %v98 = vld [vmem:[%s2] sm:$0xff]
    %v99 = vld [vmem:[%s2 + $0x8] sm:$0xff]
    %v100 = vld [vmem:[%s2 + $0x10] sm:$0x1]
    %v101 = vlaneseq
    %v102 = vshrl.u32 %v101, 7
    %v103 = vsub.s32 0, %v102
    %v104 = vrot.slane %v100, %v103
    %vm105 = vcmask 130048
    %v107 = vsel %vm105, %v97, 0
    %109 = vmatprep.subr.mxu0 0.0
    %110 = vmatpush1.msra.mxu0 %v98
    %111 = vmatprep.subr.mxu0 0.0
    %112 = vmatpush1.msra.mxu0 %v99
    %113 = vmatprep.subr.mxu0 0.0
    %114 = vmatpush1.msra.mxu0 0.0
    %115 = vmatprep.subr.mxu0 0.0
    %116 = vmatpush1.msra.mxu0 0.0
    %117 = vmatprep.subr.mxu0 0.0
    %118 = vmatpush1.msra.mxu0 0.0
    %119 = vmatprep.subr.mxu0 0.0
    %120 = vmatpush1.msra.mxu0 0.0
    %121 = vmatprep.subr.mxu0 0.0
    %122 = vmatpush1.msra.mxu0 0.0
    %123 = vmatprep.subr.mxu0 0.0
    %124 = vmatpush1.msra.mxu0 0.0
    %125 = vmatprep.subr.mxu0 0.0
    %126 = vmatpush1.msra.mxu0 0.0
    %127 = vmatprep.subr.mxu0 0.0
    %128 = vmatpush1.msra.mxu0 0.0
    %129 = vmatprep.subr.mxu0 0.0
    %130 = vmatpush1.msra.mxu0 0.0
    %131 = vmatprep.subr.mxu0 0.0
    %132 = vmatpush1.msra.mxu0 0.0
    %133 = vmatprep.subr.mxu0 0.0
    %134 = vmatpush1.msra.mxu0 0.0
    %135 = vmatprep.subr.mxu0 0.0
    %136 = vmatpush1.msra.mxu0 0.0
    %137 = vmatprep.subr.mxu0 0.0
    %138 = vmatpush1.msra.mxu0 0.0
    %139 = vmatprep.subr.mxu0 0.0
    %140 = vmatpush1.msra.mxu0 0.0
    %141 = vmatprep.subr.mxu0 0.0
    %142 = vmatpush1.msra.mxu0 0.0
    %143 = vmatprep.subr.mxu0 0.0
    %144 = vmatpush1.msra.mxu0 0.0
    %145 = vmatprep.subr.mxu0 0.0
    %146 = vmatpush1.msra.mxu0 0.0
    %147 = vmatprep.subr.mxu0 0.0
    %148 = vmatpush1.msra.mxu0 0.0
    %149 = vmatprep.subr.mxu0 0.0
    %150 = vmatpush1.msra.mxu0 0.0
    %151 = vmatprep.subr.mxu0 0.0
    %152 = vmatpush1.msra.mxu0 0.0
    %153 = vmatprep.subr.mxu0 0.0
    %154 = vmatpush1.msra.mxu0 0.0
    %155 = vmatprep.subr.mxu0 0.0
    %156 = vmatpush1.msra.mxu0 0.0
    %157 = vmatprep.subr.mxu0 0.0
    %158 = vmatpush1.msra.mxu0 0.0
    %159 = vmatprep.subr.mxu0 0.0
    %160 = vmatpush1.msra.mxu0 0.0
    %161 = vmatprep.subr.mxu0 0.0
    %162 = vmatpush1.msra.mxu0 0.0
    %163 = vmatprep.subr.mxu0 0.0
    %164 = vmatpush1.msra.mxu0 0.0
    %165 = vmatprep.subr.mxu0 0.0
    %166 = vmatpush1.msra.mxu0 0.0
    %167 = vmatprep.subr.mxu0 0.0
    %168 = vmatpush1.msra.mxu0 0.0
    %169 = vmatprep.subr.mxu0 0.0
    %170 = vmatpush1.msra.mxu0 0.0
    %171 = vmatprep.subr.mxu0 0.0
    %172 = vmatpush1.msra.mxu0 0.0
    %173 = vmatprep.mubr.f32.mxu0 0.0
    %174 = vmatmul.mubr.f32.gmra.mrb[0].mxu0 %v107
    %v175 = vpop.f32.mrb[0].mxu0
    %v176 = vadd.f32 %v104, %v175
    %v177 = vpop.f32.mrb[0].mxu0
    %178 = vdwg.mxu0
    %v179 = vmax.f32 %v176, 0.0
    %v180 = vld [vmem:[%s2 + $0x18] sm:$0xff]
    %v181 = vld [vmem:[%s2 + $0x20] sm:$0xff]
    %v182 = vld [vmem:[%s2 + $0x28] sm:$0xff]
    %v183 = vld [vmem:[%s2 + $0x30] sm:$0xff]
    %v184 = vld [vmem:[%s2 + $0x38] sm:$0x1]
    %v185 = vlaneseq
    %v186 = vshrl.u32 %v185, 7
    %v187 = vsub.s32 0, %v186
    %v188 = vrot.slane %v184, %v187
    %vm189 = vcmask 261120
    %v191 = vsel %vm189, %v179, 0
    %193 = vmatprep.subr.mxu0 0.0
    %194 = vmatpush1.msra.mxu0 %v180
    %195 = vmatprep.subr.mxu0 0.0
    %196 = vmatpush1.msra.mxu0 %v181
    %197 = vmatprep.subr.mxu0 0.0
    %198 = vmatpush1.msra.mxu0 %v182
    %199 = vmatprep.subr.mxu0 0.0
    %200 = vmatpush1.msra.mxu0 %v183
    %201 = vmatprep.subr.mxu0 0.0
    %202 = vmatpush1.msra.mxu0 0.0
    %203 = vmatprep.subr.mxu0 0.0
    %204 = vmatpush1.msra.mxu0 0.0
    %205 = vmatprep.subr.mxu0 0.0
    %206 = vmatpush1.msra.mxu0 0.0
    %207 = vmatprep.subr.mxu0 0.0
    %208 = vmatpush1.msra.mxu0 0.0
    %209 = vmatprep.subr.mxu0 0.0
    %210 = vmatpush1.msra.mxu0 0.0
    %211 = vmatprep.subr.mxu0 0.0
    %212 = vmatpush1.msra.mxu0 0.0
    %213 = vmatprep.subr.mxu0 0.0
    %214 = vmatpush1.msra.mxu0 0.0
    %215 = vmatprep.subr.mxu0 0.0
    %216 = vmatpush1.msra.mxu0 0.0
    %217 = vmatprep.subr.mxu0 0.0
    %218 = vmatpush1.msra.mxu0 0.0
    %219 = vmatprep.subr.mxu0 0.0
    %220 = vmatpush1.msra.mxu0 0.0
    %221 = vmatprep.subr.mxu0 0.0
    %222 = vmatpush1.msra.mxu0 0.0
    %223 = vmatprep.subr.mxu0 0.0
    %224 = vmatpush1.msra.mxu0 0.0
    %225 = vmatprep.subr.mxu0 0.0
    %226 = vmatpush1.msra.mxu0 0.0
    %227 = vmatprep.subr.mxu0 0.0
    %228 = vmatpush1.msra.mxu0 0.0
    %229 = vmatprep.subr.mxu0 0.0
    %230 = vmatpush1.msra.mxu0 0.0
    %231 = vmatprep.subr.mxu0 0.0
    %232 = vmatpush1.msra.mxu0 0.0
    %233 = vmatprep.subr.mxu0 0.0
    %234 = vmatpush1.msra.mxu0 0.0
    %235 = vmatprep.subr.mxu0 0.0
    %236 = vmatpush1.msra.mxu0 0.0
    %237 = vmatprep.subr.mxu0 0.0
    %238 = vmatpush1.msra.mxu0 0.0
    %239 = vmatprep.subr.mxu0 0.0
    %240 = vmatpush1.msra.mxu0 0.0
    %241 = vmatprep.subr.mxu0 0.0
    %242 = vmatpush1.msra.mxu0 0.0
    %243 = vmatprep.subr.mxu0 0.0
    %244 = vmatpush1.msra.mxu0 0.0
    %245 = vmatprep.subr.mxu0 0.0
    %246 = vmatpush1.msra.mxu0 0.0
    %247 = vmatprep.subr.mxu0 0.0
    %248 = vmatpush1.msra.mxu0 0.0
    %249 = vmatprep.subr.mxu0 0.0
    %250 = vmatpush1.msra.mxu0 0.0
    %251 = vmatprep.subr.mxu0 0.0
    %252 = vmatpush1.msra.mxu0 0.0
    %253 = vmatprep.subr.mxu0 0.0
    %254 = vmatpush1.msra.mxu0 0.0
    %255 = vmatprep.subr.mxu0 0.0
    %256 = vmatpush1.msra.mxu0 0.0
    %257 = vmatprep.mubr.f32.mxu0 0.0
    %258 = vmatmul.mubr.f32.gmra.mrb[0].mxu0 %v191
    %v259 = vpop.f32.mrb[0].mxu0
    %v260 = vadd.f32 %v188, %v259
    %v261 = vpop.f32.mrb[0].mxu0
    %262 = vdwg.mxu0
    %v263 = vsel %vm189, %v260, 0.0
    %v264 = vrot.slane %v263, 4
    %v265 = vadd.f32 %v263, %v264
    %v266 = vrot.slane %v265, 2
    %v267 = vadd.f32 %v265, %v266
    %v268 = vrot.slane %v267, 1
    %v269 = vadd.f32 %v267, %v268
    %v270 = vrcp.pop 8.0
    %v271 = vmul.f32 %v269, %v270
    %v272 = vsub.f32 %v260, %v271
    %v273 = vmul.f32 %v272, %v272
    %v274 = vsel %vm189, %v273, 0.0
    %v275 = vrot.slane %v274, 4
    %v276 = vadd.f32 %v274, %v275
    %v277 = vrot.slane %v276, 2
    %v278 = vadd.f32 %v276, %v277
    %v279 = vrot.slane %v278, 1
    %v280 = vadd.f32 %v278, %v279
    %v281 = vmul.f32 %v280, %v270
    %v282 = vadd.f32 %v281, 1e-05
    %v283 = vrsqrt.pop %v282
    %v284 = vmul.f32 %v272, %v283
    %v285 = vmax.f32 %v284, 0.0
    %286 = vmatprep.subr.mxu0 0.0
    %287 = vmatpush1.msra.mxu0 %v285
    %288 = vmatprep.subr.mxu0 0.0
    %289 = vmatpush1.msra.mxu0 0.0
    %290 = vmatprep.subr.mxu0 0.0
    %291 = vmatpush1.msra.mxu0 0.0
    %292 = vmatprep.subr.mxu0 0.0
    %293 = vmatpush1.msra.mxu0 0.0
    %294 = vmatprep.subr.mxu0 0.0
    %295 = vmatpush1.msra.mxu0 0.0
    %296 = vmatprep.subr.mxu0 0.0
    %297 = vmatpush1.msra.mxu0 0.0
    %298 = vmatprep.subr.mxu0 0.0
    %299 = vmatpush1.msra.mxu0 0.0
    %300 = vmatprep.subr.mxu0 0.0
    %301 = vmatpush1.msra.mxu0 0.0
    %302 = vmatprep.subr.mxu0 0.0
    %303 = vmatpush1.msra.mxu0 0.0
    %304 = vmatprep.subr.mxu0 0.0
    %305 = vmatpush1.msra.mxu0 0.0
    %306 = vmatprep.subr.mxu0 0.0
    %307 = vmatpush1.msra.mxu0 0.0
    %308 = vmatprep.subr.mxu0 0.0
    %309 = vmatpush1.msra.mxu0 0.0
    %310 = vmatprep.subr.mxu0 0.0
    %311 = vmatpush1.msra.mxu0 0.0
    %312 = vmatprep.subr.mxu0 0.0
    %313 = vmatpush1.msra.mxu0 0.0
    %314 = vmatprep.subr.mxu0 0.0
    %315 = vmatpush1.msra.mxu0 0.0
    %316 = vmatprep.subr.mxu0 0.0
    %317 = vmatpush1.msra.mxu0 0.0
    %318 = vmatprep.subr.mxu0 0.0
    %319 = vmatpush1.msra.mxu0 0.0
    %320 = vmatprep.subr.mxu0 0.0
    %321 = vmatpush1.msra.mxu0 0.0
    %322 = vmatprep.subr.mxu0 0.0
    %323 = vmatpush1.msra.mxu0 0.0
    %324 = vmatprep.subr.mxu0 0.0
    %325 = vmatpush1.msra.mxu0 0.0
    %326 = vmatprep.subr.mxu0 0.0
    %327 = vmatpush1.msra.mxu0 0.0
    %328 = vmatprep.subr.mxu0 0.0
    %329 = vmatpush1.msra.mxu0 0.0
    %330 = vmatprep.subr.mxu0 0.0
    %331 = vmatpush1.msra.mxu0 0.0
    %332 = vmatprep.subr.mxu0 0.0
    %333 = vmatpush1.msra.mxu0 0.0
    %334 = vmatprep.subr.mxu0 0.0
    %335 = vmatpush1.msra.mxu0 0.0
    %336 = vmatprep.subr.mxu0 0.0
    %337 = vmatpush1.msra.mxu0 0.0
    %338 = vmatprep.subr.mxu0 0.0
    %339 = vmatpush1.msra.mxu0 0.0
    %340 = vmatprep.subr.mxu0 0.0
    %341 = vmatpush1.msra.mxu0 0.0
    %342 = vmatprep.subr.mxu0 0.0
    %343 = vmatpush1.msra.mxu0 0.0
    %344 = vmatprep.subr.mxu0 0.0
    %345 = vmatpush1.msra.mxu0 0.0
    %346 = vmatprep.subr.mxu0 0.0
    %347 = vmatpush1.msra.mxu0 0.0
    %348 = vmatprep.subr.mxu0 0.0
    %349 = vmatpush1.msra.mxu0 0.0
    %350 = vmatprep.mubr.f32.mxu0 0.0
    %351 = vmatmul.mubr.f32.gmra.mrb[0].mxu0 %v25
    %v352 = vpop.f32.mrb[0].mxu0
    %v353 = vadd.f32 0.0, %v352
    %v354 = vpop.f32.mrb[0].mxu0
    %355 = vdwg.mxu0
    %v356 = vadd.f32 %v285, %v353
    %v357 = vld [vmem:[%s2 + $0x40] sm:$0xff]
    %v358 = vld [vmem:[%s2 + $0x48] sm:$0xff]
    %v359 = vld [vmem:[%s2 + $0x50] sm:$0xff]
    %v360 = vld [vmem:[%s2 + $0x58] sm:$0xff]
    %v361 = vld [vmem:[%s2 + $0x60] sm:$0x1]
    %v362 = vlaneseq
    %v363 = vshrl.u32 %v362, 7
    %v364 = vsub.s32 0, %v363
    %v365 = vrot.slane %v361, %v364
    %v367 = vsel %vm189, %v356, 0
    %369 = vmatprep.subr.mxu0 0.0
    %370 = vmatpush1.msra.mxu0 %v357
    %371 = vmatprep.subr.mxu0 0.0
    %372 = vmatpush1.msra.mxu0 %v358
    %373 = vmatprep.subr.mxu0 0.0
    %374 = vmatpush1.msra.mxu0 %v359
    %375 = vmatprep.subr.mxu0 0.0
    %376 = vmatpush1.msra.mxu0 %v360
    %377 = vmatprep.subr.mxu0 0.0
    %378 = vmatpush1.msra.mxu0 0.0
    %379 = vmatprep.subr.mxu0 0.0
    %380 = vmatpush1.msra.mxu0 0.0
    %381 = vmatprep.subr.mxu0 0.0
    %382 = vmatpush1.msra.mxu0 0.0
    %383 = vmatprep.subr.mxu0 0.0
    %384 = vmatpush1.msra.mxu0 0.0
    %385 = vmatprep.subr.mxu0 0.0
    %386 = vmatpush1.msra.mxu0 0.0
    %387 = vmatprep.subr.mxu0 0.0
    %388 = vmatpush1.msra.mxu0 0.0
    %389 = vmatprep.subr.mxu0 0.0
    %390 = vmatpush1.msra.mxu0 0.0
    %391 = vmatprep.subr.mxu0 0.0
    %392 = vmatpush1.msra.mxu0 0.0
    %393 = vmatprep.subr.mxu0 0.0
    %394 = vmatpush1.msra.mxu0 0.0
    %395 = vmatprep.subr.mxu0 0.0
    %396 = vmatpush1.msra.mxu0 0.0
    %397 = vmatprep.subr.mxu0 0.0
    %398 = vmatpush1.msra.mxu0 0.0
    %399 = vmatprep.subr.mxu0 0.0
    %400 = vmatpush1.msra.mxu0 0.0
    %401 = vmatprep.subr.mxu0 0.0
    %402 = vmatpush1.msra.mxu0 0.0
    %403 = vmatprep.subr.mxu0 0.0
    %404 = vmatpush1.msra.mxu0 0.0
    %405 = vmatprep.subr.mxu0 0.0
    %406 = vmatpush1.msra.mxu0 0.0
    %407 = vmatprep.subr.mxu0 0.0
    %408 = vmatpush1.msra.mxu0 0.0
    %409 = vmatprep.subr.mxu0 0.0
    %410 = vmatpush1.msra.mxu0 0.0
    %411 = vmatprep.subr.mxu0 0.0
    %412 = vmatpush1.msra.mxu0 0.0
    %413 = vmatprep.subr.mxu0 0.0
    %414 = vmatpush1.msra.mxu0 0.0
    %415 = vmatprep.subr.mxu0 0.0
    %416 = vmatpush1.msra.mxu0 0.0
    %417 = vmatprep.subr.mxu0 0.0
    %418 = vmatpush1.msra.mxu0 0.0
    %419 = vmatprep.subr.mxu0 0.0
    %420 = vmatpush1.msra.mxu0 0.0
    %421 = vmatprep.subr.mxu0 0.0
    %422 = vmatpush1.msra.mxu0 0.0
    %423 = vmatprep.subr.mxu0 0.0
    %424 = vmatpush1.msra.mxu0 0.0
    %425 = vmatprep.subr.mxu0 0.0
    %426 = vmatpush1.msra.mxu0 0.0
    %427 = vmatprep.subr.mxu0 0.0
    %428 = vmatpush1.msra.mxu0 0.0
    %429 = vmatprep.subr.mxu0 0.0
    %430 = vmatpush1.msra.mxu0 0.0
    %431 = vmatprep.subr.mxu0 0.0
    %432 = vmatpush1.msra.mxu0 0.0
    %433 = vmatprep.mubr.f32.mxu0 0.0
    %434 = vmatmul.mubr.f32.gmra.mrb[0].mxu0 %v367
    %v435 = vpop.f32.mrb[0].mxu0
    %v436 = vadd.f32 %v365, %v435
    %v437 = vpop.f32.mrb[0].mxu0
    %438 = vdwg.mxu0
    %v439 = vmax.f32 %v436, 0.0
    %v440 = vld [vmem:[%s2 + $0x68] sm:$0xff]
    %v441 = vld [vmem:[%s2 + $0x70] sm:$0xff]
    %v442 = vld [vmem:[%s2 + $0x78] sm:$0x1]
    %v443 = vlaneseq
    %v444 = vshrl.u32 %v443, 7
    %v445 = vsub.s32 0, %v444
    %v446 = vrot.slane %v442, %v445
    %v448 = vsel %vm105, %v439, 0
    %450 = vmatprep.subr.mxu0 0.0
    %451 = vmatpush1.msra.mxu0 %v440
    %452 = vmatprep.subr.mxu0 0.0
    %453 = vmatpush1.msra.mxu0 %v441
    %454 = vmatprep.subr.mxu0 0.0
    %455 = vmatpush1.msra.mxu0 0.0
    %456 = vmatprep.subr.mxu0 0.0
    %457 = vmatpush1.msra.mxu0 0.0
    %458 = vmatprep.subr.mxu0 0.0
    %459 = vmatpush1.msra.mxu0 0.0
    %460 = vmatprep.subr.mxu0 0.0
    %461 = vmatpush1.msra.mxu0 0.0
    %462 = vmatprep.subr.mxu0 0.0
    %463 = vmatpush1.msra.mxu0 0.0
    %464 = vmatprep.subr.mxu0 0.0
    %465 = vmatpush1.msra.mxu0 0.0
    %466 = vmatprep.subr.mxu0 0.0
    %467 = vmatpush1.msra.mxu0 0.0
    %468 = vmatprep.subr.mxu0 0.0
    %469 = vmatpush1.msra.mxu0 0.0
    %470 = vmatprep.subr.mxu0 0.0
    %471 = vmatpush1.msra.mxu0 0.0
    %472 = vmatprep.subr.mxu0 0.0
    %473 = vmatpush1.msra.mxu0 0.0
    %474 = vmatprep.subr.mxu0 0.0
    %475 = vmatpush1.msra.mxu0 0.0
    %476 = vmatprep.subr.mxu0 0.0
    %477 = vmatpush1.msra.mxu0 0.0
    %478 = vmatprep.subr.mxu0 0.0
    %479 = vmatpush1.msra.mxu0 0.0
    %480 = vmatprep.subr.mxu0 0.0
    %481 = vmatpush1.msra.mxu0 0.0
    %482 = vmatprep.subr.mxu0 0.0
    %483 = vmatpush1.msra.mxu0 0.0
    %484 = vmatprep.subr.mxu0 0.0
    %485 = vmatpush1.msra.mxu0 0.0
    %486 = vmatprep.subr.mxu0 0.0
    %487 = vmatpush1.msra.mxu0 0.0
    %488 = vmatprep.subr.mxu0 0.0
    %489 = vmatpush1.msra.mxu0 0.0
    %490 = vmatprep.subr.mxu0 0.0
    %491 = vmatpush1.msra.mxu0 0.0
    %492 = vmatprep.subr.mxu0 0.0
    %493 = vmatpush1.msra.mxu0 0.0
    %494 = vmatprep.subr.mxu0 0.0
    %495 = vmatpush1.msra.mxu0 0.0
    %496 = vmatprep.subr.mxu0 0.0
    %497 = vmatpush1.msra.mxu0 0.0
    %498 = vmatprep.subr.mxu0 0.0
    %499 = vmatpush1.msra.mxu0 0.0
    %500 = vmatprep.subr.mxu0 0.0
    %501 = vmatpush1.msra.mxu0 0.0
    %502 = vmatprep.subr.mxu0 0.0
    %503 = vmatpush1.msra.mxu0 0.0
    %504 = vmatprep.subr.mxu0 0.0
    %505 = vmatpush1.msra.mxu0 0.0
    %506 = vmatprep.subr.mxu0 0.0
    %507 = vmatpush1.msra.mxu0 0.0
    %508 = vmatprep.subr.mxu0 0.0
    %509 = vmatpush1.msra.mxu0 0.0
    %510 = vmatprep.subr.mxu0 0.0
    %511 = vmatpush1.msra.mxu0 0.0
    %512 = vmatprep.subr.mxu0 0.0
    %513 = vmatpush1.msra.mxu0 0.0
    %514 = vmatprep.mubr.f32.mxu0 0.0
    %515 = vmatmul.mubr.f32.gmra.mrb[0].mxu0 %v448
    %v516 = vpop.f32.mrb[0].mxu0
    %v517 = vadd.f32 %v446, %v516
    %v518 = vpop.f32.mrb[0].mxu0
    %519 = vdwg.mxu0
    %v520 = vld [vmem:[%s2 + $0x80] sm:$0xff]
    %v521 = vld [vmem:[%s2 + $0x88] sm:$0xff]
    %v522 = vld [vmem:[%s2 + $0x90] sm:$0x1]
    %v523 = vlaneseq
    %v524 = vshrl.u32 %v523, 7
    %v525 = vsub.s32 0, %v524
    %v526 = vrot.slane %v522, %v525
    %v528 = vsel %vm105, %v517, 0
    %530 = vmatprep.subr.mxu0 0.0
    %531 = vmatpush1.msra.mxu0 %v520
    %532 = vmatprep.subr.mxu0 0.0
    %533 = vmatpush1.msra.mxu0 %v521
    %534 = vmatprep.subr.mxu0 0.0
    %535 = vmatpush1.msra.mxu0 0.0
    %536 = vmatprep.subr.mxu0 0.0
    %537 = vmatpush1.msra.mxu0 0.0
    %538 = vmatprep.subr.mxu0 0.0
    %539 = vmatpush1.msra.mxu0 0.0
    %540 = vmatprep.subr.mxu0 0.0
    %541 = vmatpush1.msra.mxu0 0.0
    %542 = vmatprep.subr.mxu0 0.0
    %543 = vmatpush1.msra.mxu0 0.0
    %544 = vmatprep.subr.mxu0 0.0
    %545 = vmatpush1.msra.mxu0 0.0
    %546 = vmatprep.subr.mxu0 0.0
    %547 = vmatpush1.msra.mxu0 0.0
    %548 = vmatprep.subr.mxu0 0.0
    %549 = vmatpush1.msra.mxu0 0.0
    %550 = vmatprep.subr.mxu0 0.0
    %551 = vmatpush1.msra.mxu0 0.0
    %552 = vmatprep.subr.mxu0 0.0
    %553 = vmatpush1.msra.mxu0 0.0
    %554 = vmatprep.subr.mxu0 0.0
    %555 = vmatpush1.msra.mxu0 0.0
    %556 = vmatprep.subr.mxu0 0.0
    %557 = vmatpush1.msra.mxu0 0.0
    %558 = vmatprep.subr.mxu0 0.0
    %559 = vmatpush1.msra.mxu0 0.0
    %560 = vmatprep.subr.mxu0 0.0
    %561 = vmatpush1.msra.mxu0 0.0
    %562 = vmatprep.subr.mxu0 0.0
    %563 = vmatpush1.msra.mxu0 0.0
    %564 = vmatprep.subr.mxu0 0.0
    %565 = vmatpush1.msra.mxu0 0.0
    %566 = vmatprep.subr.mxu0 0.0
    %567 = vmatpush1.msra.mxu0 0.0
    %568 = vmatprep.subr.mxu0 0.0
    %569 = vmatpush1.msra.mxu0 0.0
    %570 = vmatprep.subr.mxu0 0.0
    %571 = vmatpush1.msra.mxu0 0.0
    %572 = vmatprep.subr.mxu0 0.0
    %573 = vmatpush1.msra.mxu0 0.0
    %574 = vmatprep.subr.mxu0 0.0
    %575 = vmatpush1.msra.mxu0 0.0
    %576 = vmatprep.subr.mxu0 0.0
    %577 = vmatpush1.msra.mxu0 0.0
    %578 = vmatprep.subr.mxu0 0.0
    %579 = vmatpush1.msra.mxu0 0.0
    %580 = vmatprep.subr.mxu0 0.0
    %581 = vmatpush1.msra.mxu0 0.0
    %582 = vmatprep.subr.mxu0 0.0
    %583 = vmatpush1.msra.mxu0 0.0
    %584 = vmatprep.subr.mxu0 0.0
    %585 = vmatpush1.msra.mxu0 0.0
    %586 = vmatprep.subr.mxu0 0.0
    %587 = vmatpush1.msra.mxu0 0.0
    %588 = vmatprep.subr.mxu0 0.0
    %589 = vmatpush1.msra.mxu0 0.0
    %590 = vmatprep.subr.mxu0 0.0
    %591 = vmatpush1.msra.mxu0 0.0
    %592 = vmatprep.subr.mxu0 0.0
    %593 = vmatpush1.msra.mxu0 0.0
    %594 = vmatprep.mubr.f32.mxu0 0.0
    %595 = vmatmul.mubr.f32.gmra.mrb[0].mxu0 %v528
    %v596 = vpop.f32.mrb[0].mxu0
    %v597 = vadd.f32 %v526, %v596
    %v598 = vpop.f32.mrb[0].mxu0
    %599 = vdwg.mxu0
    %v600 = vmax.f32 %v597, 0.0
    %v601 = vld [vmem:[%s2 + $0x98] sm:$0xff]
    %v602 = vld [vmem:[%s2 + $0xa0] sm:$0xff]
    %v603 = vld [vmem:[%s2 + $0xa8] sm:$0xff]
    %v604 = vld [vmem:[%s2 + $0xb0] sm:$0xff]
    %v605 = vld [vmem:[%s2 + $0xb8] sm:$0xff]
    %v606 = vld [vmem:[%s2 + $0xc0] sm:$0xff]
    %v607 = vld [vmem:[%s2 + $0xc8] sm:$0x1]
    %v608 = vlaneseq
    %v609 = vshrl.u32 %v608, 7
    %v610 = vsub.s32 0, %v609
    %v611 = vrot.slane %v607, %v610
    %vm612 = vcmask 392192
    %v614 = vsel %vm612, %v600, 0
    %616 = vmatprep.subr.mxu0 0.0
    %617 = vmatpush1.msra.mxu0 %v601
    %618 = vmatprep.subr.mxu0 0.0
    %619 = vmatpush1.msra.mxu0 %v602
    %620 = vmatprep.subr.mxu0 0.0
    %621 = vmatpush1.msra.mxu0 %v603
    %622 = vmatprep.subr.mxu0 0.0
    %623 = vmatpush1.msra.mxu0 %v604
    %624 = vmatprep.subr.mxu0 0.0
    %625 = vmatpush1.msra.mxu0 %v605
    %626 = vmatprep.subr.mxu0 0.0
    %627 = vmatpush1.msra.mxu0 %v606
    %628 = vmatprep.subr.mxu0 0.0
    %629 = vmatpush1.msra.mxu0 0.0
    %630 = vmatprep.subr.mxu0 0.0
    %631 = vmatpush1.msra.mxu0 0.0
    %632 = vmatprep.subr.mxu0 0.0
    %633 = vmatpush1.msra.mxu0 0.0
    %634 = vmatprep.subr.mxu0 0.0
    %635 = vmatpush1.msra.mxu0 0.0
    %636 = vmatprep.subr.mxu0 0.0
    %637 = vmatpush1.msra.mxu0 0.0
    %638 = vmatprep.subr.mxu0 0.0
    %639 = vmatpush1.msra.mxu0 0.0
    %640 = vmatprep.subr.mxu0 0.0
    %641 = vmatpush1.msra.mxu0 0.0
    %642 = vmatprep.subr.mxu0 0.0
    %643 = vmatpush1.msra.mxu0 0.0
    %644 = vmatprep.subr.mxu0 0.0
    %645 = vmatpush1.msra.mxu0 0.0
    %646 = vmatprep.subr.mxu0 0.0
    %647 = vmatpush1.msra.mxu0 0.0
    %648 = vmatprep.subr.mxu0 0.0
    %649 = vmatpush1.msra.mxu0 0.0
    %650 = vmatprep.subr.mxu0 0.0
    %651 = vmatpush1.msra.mxu0 0.0
    %652 = vmatprep.subr.mxu0 0.0
    %653 = vmatpush1.msra.mxu0 0.0
    %654 = vmatprep.subr.mxu0 0.0
    %655 = vmatpush1.msra.mxu0 0.0
    %656 = vmatprep.subr.mxu0 0.0
    %657 = vmatpush1.msra.mxu0 0.0
    %658 = vmatprep.subr.mxu0 0.0
    %659 = vmatpush1.msra.mxu0 0.0
    %660 = vmatprep.subr.mxu0 0.0
    %661 = vmatpush1.msra.mxu0 0.0
    %662 = vmatprep.subr.mxu0 0.0
    %663 = vmatpush1.msra.mxu0 0.0
    %664 = vmatprep.subr.mxu0 0.0
    %665 = vmatpush1.msra.mxu0 0.0
    %666 = vmatprep.subr.mxu0 0.0
    %667 = vmatpush1.msra.mxu0 0.0
    %668 = vmatprep.subr.mxu0 0.0
    %669 = vmatpush1.msra.mxu0 0.0
    %670 = vmatprep.subr.mxu0 0.0
    %671 = vmatpush1.msra.mxu0 0.0
    %672 = vmatprep.subr.mxu0 0.0
    %673 = vmatpush1.msra.mxu0 0.0
    %674 = vmatprep.subr.mxu0 0.0
    %675 = vmatpush1.msra.mxu0 0.0
    %676 = vmatprep.subr.mxu0 0.0
    %677 = vmatpush1.msra.mxu0 0.0
    %678 = vmatprep.subr.mxu0 0.0
    %679 = vmatpush1.msra.mxu0 0.0
    %680 = vmatprep.mubr.f32.mxu0 0.0
    %681 = vmatmul.mubr.f32.gmra.mrb[0].mxu0 %v614
    %v682 = vpop.f32.mrb[0].mxu0
    %v683 = vadd.f32 %v611, %v682
    %v684 = vpop.f32.mrb[0].mxu0
    %685 = vdwg.mxu0
    %v686 = vmax.f32 %v683, 0.0
    %v687 = vld [vmem:[%s2 + $0xd0] sm:$0xff]
    %v688 = vld [vmem:[%s2 + $0xd8] sm:$0xff]
    %v689 = vld [vmem:[%s2 + $0xe0] sm:$0x1]
    %v690 = vlaneseq
    %v691 = vshrl.u32 %v690, 7
    %v692 = vsub.s32 0, %v691
    %v693 = vrot.slane %v689, %v692
    %695 = vrot.lane.b32.xlu0 %v686, 64
    %v696 = vpop.permute.xlu0 %695
    %v697 = vsel %vm105, %v696, 0
    %699 = vmatprep.subr.mxu0 0.0
    %700 = vmatpush1.msra.mxu0 %v687
    %701 = vmatprep.subr.mxu0 0.0
    %702 = vmatpush1.msra.mxu0 %v688
    %703 = vmatprep.subr.mxu0 0.0
    %704 = vmatpush1.msra.mxu0 0.0
    %705 = vmatprep.subr.mxu0 0.0
    %706 = vmatpush1.msra.mxu0 0.0
    %707 = vmatprep.subr.mxu0 0.0
    %708 = vmatpush1.msra.mxu0 0.0
    %709 = vmatprep.subr.mxu0 0.0
    %710 = vmatpush1.msra.mxu0 0.0
    %711 = vmatprep.subr.mxu0 0.0
    %712 = vmatpush1.msra.mxu0 0.0
    %713 = vmatprep.subr.mxu0 0.0
    %714 = vmatpush1.msra.mxu0 0.0
    %715 = vmatprep.subr.mxu0 0.0
    %716 = vmatpush1.msra.mxu0 0.0
    %717 = vmatprep.subr.mxu0 0.0
    %718 = vmatpush1.msra.mxu0 0.0
    %719 = vmatprep.subr.mxu0 0.0
    %720 = vmatpush1.msra.mxu0 0.0
    %721 = vmatprep.subr.mxu0 0.0
    %722 = vmatpush1.msra.mxu0 0.0
    %723 = vmatprep.subr.mxu0 0.0
    %724 = vmatpush1.msra.mxu0 0.0
    %725 = vmatprep.subr.mxu0 0.0
    %726 = vmatpush1.msra.mxu0 0.0
    %727 = vmatprep.subr.mxu0 0.0
    %728 = vmatpush1.msra.mxu0 0.0
    %729 = vmatprep.subr.mxu0 0.0
    %730 = vmatpush1.msra.mxu0 0.0
    %731 = vmatprep.subr.mxu0 0.0
    %732 = vmatpush1.msra.mxu0 0.0
    %733 = vmatprep.subr.mxu0 0.0
    %734 = vmatpush1.msra.mxu0 0.0
    %735 = vmatprep.subr.mxu0 0.0
    %736 = vmatpush1.msra.mxu0 0.0
    %737 = vmatprep.subr.mxu0 0.0
    %738 = vmatpush1.msra.mxu0 0.0
    %739 = vmatprep.subr.mxu0 0.0
    %740 = vmatpush1.msra.mxu0 0.0
    %741 = vmatprep.subr.mxu0 0.0
    %742 = vmatpush1.msra.mxu0 0.0
    %743 = vmatprep.subr.mxu0 0.0
    %744 = vmatpush1.msra.mxu0 0.0
    %745 = vmatprep.subr.mxu0 0.0
    %746 = vmatpush1.msra.mxu0 0.0
    %747 = vmatprep.subr.mxu0 0.0
    %748 = vmatpush1.msra.mxu0 0.0
    %749 = vmatprep.subr.mxu0 0.0
    %750 = vmatpush1.msra.mxu0 0.0
    %751 = vmatprep.subr.mxu0 0.0
    %752 = vmatpush1.msra.mxu0 0.0
    %753 = vmatprep.subr.mxu0 0.0
    %754 = vmatpush1.msra.mxu0 0.0
    %755 = vmatprep.subr.mxu0 0.0
    %756 = vmatpush1.msra.mxu0 0.0
    %757 = vmatprep.subr.mxu0 0.0
    %758 = vmatpush1.msra.mxu0 0.0
    %759 = vmatprep.subr.mxu0 0.0
    %760 = vmatpush1.msra.mxu0 0.0
    %761 = vmatprep.subr.mxu0 0.0
    %762 = vmatpush1.msra.mxu0 0.0
    %763 = vmatprep.mubr.f32.mxu0 0.0
    %764 = vmatmul.mubr.f32.gmra.mrb[0].mxu0 %v697
    %v765 = vpop.f32.mrb[0].mxu0
    %v766 = vadd.f32 %v693, %v765
    %v767 = vpop.f32.mrb[0].mxu0
    %768 = vdwg.mxu0
    %v769 = vmax.f32 %v766, 0.0
    %v770 = vmul.f32 %v683, 1.442695
    %v771 = vpow.pop %v770
    %v772 = vld [vmem:[%s2 + $0x1f8] sm:$0xff]
    %774 = vrot.lane.b32.xlu0 %v771, 96
    %v775 = vpop.permute.xlu0 %774
    %v777 = vmul.f32 %v772, %v775
    %v778 = vadd.f32 %v683, %v777
    %v779 = vsub.f32 %v285, %v778
    %v780 = vmul.f32 %v779, %v779
    %v781 = vsel %vm189, %v780, 0.0
    %782 = vadd.xlane.f32.xlu0 %v781
    %v783 = vpop.xlane.xlu0 %782
    %v784 = vrot.slane %v783, 4
    %v785 = vadd.f32 %v783, %v784
    %v786 = vrot.slane %v785, 2
    %v787 = vadd.f32 %v785, %v786
    %v788 = vrot.slane %v787, 1
    %v789 = vadd.f32 %v787, %v788
    %v790 = vmul.f32 %v789, 0.00390625
    %v791 = vadd.f32 %v790, 0.0
    %793 = vset.pattern.permute.xlu0 0
    %794 = vperm.xlu0 %793, %v22
    %v795 = vpop.permute.xlu0 %794
    %v797 = vmul.f32 %v356, %v795
    %v798 = vsub.f32 %v683, %v797
    %v799 = vmul.f32 %v683, 2.0
    %v800 = vsub.f32 -1.0, %v799
    %v801 = vmul.f32 %v798, %v798
    %803 = vrot.lane.b32.xlu0 %v801, 32
    %v804 = vpop.permute.xlu0 %803
    %v806 = vadd.f32 %v800, %v804
    %v807 = vmul.f32 %v771, %v771
    %v808 = vadd.f32 %v806, %v807
    %810 = vrot.lane.b32.xlu0 %v808, 96
    %v811 = vpop.permute.xlu0 %810
    %v813 = vsel %vm189, %v811, 0.0
    %814 = vadd.xlane.f32.xlu0 %v813
    %v815 = vpop.xlane.xlu0 %814
    %v816 = vrot.slane %v815, 4
    %v817 = vadd.f32 %v815, %v816
    %v818 = vrot.slane %v817, 2
    %v819 = vadd.f32 %v817, %v818
    %v820 = vrot.slane %v819, 1
    %v821 = vadd.f32 %v819, %v820
    %v822 = vmul.f32 %v821, 0.00390625
    %v823 = vmul.f32 %v822, 0.5
    %v824 = vadd.f32 %v823, 0.0
    %v825 = vsub.f32 %v769, %v20
    %v826 = vmul.f32 %v825, %v825
    %v827 = vadd.f32 %v826, 0.0
    %vm828 = vcmask 7168
    %v829 = vsel %vm828, %v827, 0.0
    %v830 = vrot.slane %v829, 4
    %v831 = vadd.f32 %v829, %v830
    %v832 = vrot.slane %v831, 2
    %v833 = vadd.f32 %v831, %v832
    %v834 = vrot.slane %v833, 1
    %v835 = vadd.f32 %v833, %v834
    %v836 = vmul.f32 %v835, 0.125
    %v837 = vadd.f32 %v836, 0.0
    %v838 = vld [vmem:[%s2 + $0xe8] sm:$0xff]
    %v839 = vld [vmem:[%s2 + $0xf0] sm:$0xff]
    %v840 = vld [vmem:[%s2 + $0xf8] sm:$0xff]
    %v841 = vld [vmem:[%s2 + $0x100] sm:$0xff]
    %v842 = vld [vmem:[%s2 + $0x108] sm:$0x1]
    %v843 = vlaneseq
    %v844 = vshrl.u32 %v843, 7
    %v845 = vsub.s32 0, %v844
    %v846 = vrot.slane %v842, %v845
    %v848 = vsel %vm189, %v285, 0
    %850 = vmatprep.subr.mxu0 0.0
    %851 = vmatpush1.msra.mxu0 %v838
    %852 = vmatprep.subr.mxu0 0.0
    %853 = vmatpush1.msra.mxu0 %v839
    %854 = vmatprep.subr.mxu0 0.0
    %855 = vmatpush1.msra.mxu0 %v840
    %856 = vmatprep.subr.mxu0 0.0
    %857 = vmatpush1.msra.mxu0 %v841
    %858 = vmatprep.subr.mxu0 0.0
    %859 = vmatpush1.msra.mxu0 0.0
    %860 = vmatprep.subr.mxu0 0.0
    %861 = vmatpush1.msra.mxu0 0.0
    %862 = vmatprep.subr.mxu0 0.0
    %863 = vmatpush1.msra.mxu0 0.0
    %864 = vmatprep.subr.mxu0 0.0
    %865 = vmatpush1.msra.mxu0 0.0
    %866 = vmatprep.subr.mxu0 0.0
    %867 = vmatpush1.msra.mxu0 0.0
    %868 = vmatprep.subr.mxu0 0.0
    %869 = vmatpush1.msra.mxu0 0.0
    %870 = vmatprep.subr.mxu0 0.0
    %871 = vmatpush1.msra.mxu0 0.0
    %872 = vmatprep.subr.mxu0 0.0
    %873 = vmatpush1.msra.mxu0 0.0
    %874 = vmatprep.subr.mxu0 0.0
    %875 = vmatpush1.msra.mxu0 0.0
    %876 = vmatprep.subr.mxu0 0.0
    %877 = vmatpush1.msra.mxu0 0.0
    %878 = vmatprep.subr.mxu0 0.0
    %879 = vmatpush1.msra.mxu0 0.0
    %880 = vmatprep.subr.mxu0 0.0
    %881 = vmatpush1.msra.mxu0 0.0
    %882 = vmatprep.subr.mxu0 0.0
    %883 = vmatpush1.msra.mxu0 0.0
    %884 = vmatprep.subr.mxu0 0.0
    %885 = vmatpush1.msra.mxu0 0.0
    %886 = vmatprep.subr.mxu0 0.0
    %887 = vmatpush1.msra.mxu0 0.0
    %888 = vmatprep.subr.mxu0 0.0
    %889 = vmatpush1.msra.mxu0 0.0
    %890 = vmatprep.subr.mxu0 0.0
    %891 = vmatpush1.msra.mxu0 0.0
    %892 = vmatprep.subr.mxu0 0.0
    %893 = vmatpush1.msra.mxu0 0.0
    %894 = vmatprep.subr.mxu0 0.0
    %895 = vmatpush1.msra.mxu0 0.0
    %896 = vmatprep.subr.mxu0 0.0
    %897 = vmatpush1.msra.mxu0 0.0
    %898 = vmatprep.subr.mxu0 0.0
    %899 = vmatpush1.msra.mxu0 0.0
    %900 = vmatprep.subr.mxu0 0.0
    %901 = vmatpush1.msra.mxu0 0.0
    %902 = vmatprep.subr.mxu0 0.0
    %903 = vmatpush1.msra.mxu0 0.0
    %904 = vmatprep.subr.mxu0 0.0
    %905 = vmatpush1.msra.mxu0 0.0
    %906 = vmatprep.subr.mxu0 0.0
    %907 = vmatpush1.msra.mxu0 0.0
    %908 = vmatprep.subr.mxu0 0.0
    %909 = vmatpush1.msra.mxu0 0.0
    %910 = vmatprep.subr.mxu0 0.0
    %911 = vmatpush1.msra.mxu0 0.0
    %912 = vmatprep.subr.mxu0 0.0
    %913 = vmatpush1.msra.mxu0 0.0
    %914 = vmatprep.mubr.f32.mxu0 0.0
    %915 = vmatmul.mubr.f32.gmra.mrb[0].mxu0 %v848
    %v916 = vpop.f32.mrb[0].mxu0
    %v917 = vadd.f32 %v846, %v916
    %v918 = vpop.f32.mrb[0].mxu0
    %919 = vdwg.mxu0
    %v920 = vmax.f32 %v917, 0.0
    %v921 = vld [vmem:[%s2 + $0x110] sm:$0xff]
    %v922 = vld [vmem:[%s2 + $0x118] sm:$0xff]
    %v923 = vld [vmem:[%s2 + $0x120] sm:$0xff]
    %v924 = vld [vmem:[%s2 + $0x128] sm:$0xff]
    %v925 = vld [vmem:[%s2 + $0x130] sm:$0xff]
    %v926 = vld [vmem:[%s2 + $0x138] sm:$0xff]
    %v927 = vld [vmem:[%s2 + $0x140] sm:$0xff]
    %v928 = vld [vmem:[%s2 + $0x148] sm:$0xff]
    %v929 = vld [vmem:[%s2 + $0x150] sm:$0xff]
    %v930 = vld [vmem:[%s2 + $0x158] sm:$0xff]
    %v931 = vld [vmem:[%s2 + $0x160] sm:$0xff]
    %v932 = vld [vmem:[%s2 + $0x168] sm:$0xff]
    %v933 = vld [vmem:[%s2 + $0x170] sm:$0x1]
    %v934 = vlaneseq
    %v935 = vshrl.u32 %v934, 7
    %v936 = vsub.s32 0, %v935
    %v937 = vrot.slane %v933, %v936
    %vm938 = vcmask 785408
    %v940 = vsel %vm938, %v920, 0
    %942 = vmatprep.subr.mxu0 0.0
    %943 = vmatpush1.msra.mxu0 %v921
    %944 = vmatprep.subr.mxu0 0.0
    %945 = vmatpush1.msra.mxu0 %v922
    %946 = vmatprep.subr.mxu0 0.0
    %947 = vmatpush1.msra.mxu0 %v923
    %948 = vmatprep.subr.mxu0 0.0
    %949 = vmatpush1.msra.mxu0 %v924
    %950 = vmatprep.subr.mxu0 0.0
    %951 = vmatpush1.msra.mxu0 %v925
    %952 = vmatprep.subr.mxu0 0.0
    %953 = vmatpush1.msra.mxu0 %v926
    %954 = vmatprep.subr.mxu0 0.0
    %955 = vmatpush1.msra.mxu0 %v927
    %956 = vmatprep.subr.mxu0 0.0
    %957 = vmatpush1.msra.mxu0 %v928
    %958 = vmatprep.subr.mxu0 0.0
    %959 = vmatpush1.msra.mxu0 %v929
    %960 = vmatprep.subr.mxu0 0.0
    %961 = vmatpush1.msra.mxu0 %v930
    %962 = vmatprep.subr.mxu0 0.0
    %963 = vmatpush1.msra.mxu0 %v931
    %964 = vmatprep.subr.mxu0 0.0
    %965 = vmatpush1.msra.mxu0 %v932
    %966 = vmatprep.subr.mxu0 0.0
    %967 = vmatpush1.msra.mxu0 0.0
    %968 = vmatprep.subr.mxu0 0.0
    %969 = vmatpush1.msra.mxu0 0.0
    %970 = vmatprep.subr.mxu0 0.0
    %971 = vmatpush1.msra.mxu0 0.0
    %972 = vmatprep.subr.mxu0 0.0
    %973 = vmatpush1.msra.mxu0 0.0
    %974 = vmatprep.subr.mxu0 0.0
    %975 = vmatpush1.msra.mxu0 0.0
    %976 = vmatprep.subr.mxu0 0.0
    %977 = vmatpush1.msra.mxu0 0.0
    %978 = vmatprep.subr.mxu0 0.0
    %979 = vmatpush1.msra.mxu0 0.0
    %980 = vmatprep.subr.mxu0 0.0
    %981 = vmatpush1.msra.mxu0 0.0
    %982 = vmatprep.subr.mxu0 0.0
    %983 = vmatpush1.msra.mxu0 0.0
    %984 = vmatprep.subr.mxu0 0.0
    %985 = vmatpush1.msra.mxu0 0.0
    %986 = vmatprep.subr.mxu0 0.0
    %987 = vmatpush1.msra.mxu0 0.0
    %988 = vmatprep.subr.mxu0 0.0
    %989 = vmatpush1.msra.mxu0 0.0
    %990 = vmatprep.subr.mxu0 0.0
    %991 = vmatpush1.msra.mxu0 0.0
    %992 = vmatprep.subr.mxu0 0.0
    %993 = vmatpush1.msra.mxu0 0.0
    %994 = vmatprep.subr.mxu0 0.0
    %995 = vmatpush1.msra.mxu0 0.0
    %996 = vmatprep.subr.mxu0 0.0
    %997 = vmatpush1.msra.mxu0 0.0
    %998 = vmatprep.subr.mxu0 0.0
    %999 = vmatpush1.msra.mxu0 0.0
    %1000 = vmatprep.subr.mxu0 0.0
    %1001 = vmatpush1.msra.mxu0 0.0
    %1002 = vmatprep.subr.mxu0 0.0
    %1003 = vmatpush1.msra.mxu0 0.0
    %1004 = vmatprep.subr.mxu0 0.0
    %1005 = vmatpush1.msra.mxu0 0.0
    %1006 = vmatprep.mubr.f32.mxu0 0.0
    %1007 = vmatmul.mubr.f32.gmra.mrb[0].mxu0 %v940
    %v1008 = vpop.f32.mrb[0].mxu0
    %v1009 = vadd.f32 %v937, %v1008
    %v1010 = vpop.f32.mrb[0].mxu0
    %1011 = vdwg.mxu0
    %v1012 = vmax.f32 %v1009, 0.0
    %v1013 = vld [vmem:[%s2 + $0x178] sm:$0xff]
    %v1014 = vld [vmem:[%s2 + $0x180] sm:$0xff]
    %v1015 = vld [vmem:[%s2 + $0x188] sm:$0xff]
    %v1016 = vld [vmem:[%s2 + $0x190] sm:$0xff]
    %v1017 = vld [vmem:[%s2 + $0x198] sm:$0x1]
    %v1018 = vlaneseq
    %v1019 = vshrl.u32 %v1018, 7
    %v1020 = vsub.s32 0, %v1019
    %v1021 = vrot.slane %v1017, %v1020
    %1023 = vrot.lane.b32.xlu0 %v1012, 96
    %v1024 = vpop.permute.xlu0 %1023
    %v1025 = vsel %vm189, %v1024, 0
    %1027 = vmatprep.subr.mxu0 0.0
    %1028 = vmatpush1.msra.mxu0 %v1013
    %1029 = vmatprep.subr.mxu0 0.0
    %1030 = vmatpush1.msra.mxu0 %v1014
    %1031 = vmatprep.subr.mxu0 0.0
    %1032 = vmatpush1.msra.mxu0 %v1015
    %1033 = vmatprep.subr.mxu0 0.0
    %1034 = vmatpush1.msra.mxu0 %v1016
    %1035 = vmatprep.subr.mxu0 0.0
    %1036 = vmatpush1.msra.mxu0 0.0
    %1037 = vmatprep.subr.mxu0 0.0
    %1038 = vmatpush1.msra.mxu0 0.0
    %1039 = vmatprep.subr.mxu0 0.0
    %1040 = vmatpush1.msra.mxu0 0.0
    %1041 = vmatprep.subr.mxu0 0.0
    %1042 = vmatpush1.msra.mxu0 0.0
    %1043 = vmatprep.subr.mxu0 0.0
    %1044 = vmatpush1.msra.mxu0 0.0
    %1045 = vmatprep.subr.mxu0 0.0
    %1046 = vmatpush1.msra.mxu0 0.0
    %1047 = vmatprep.subr.mxu0 0.0
    %1048 = vmatpush1.msra.mxu0 0.0
    %1049 = vmatprep.subr.mxu0 0.0
    %1050 = vmatpush1.msra.mxu0 0.0
    %1051 = vmatprep.subr.mxu0 0.0
    %1052 = vmatpush1.msra.mxu0 0.0
    %1053 = vmatprep.subr.mxu0 0.0
    %1054 = vmatpush1.msra.mxu0 0.0
    %1055 = vmatprep.subr.mxu0 0.0
    %1056 = vmatpush1.msra.mxu0 0.0
    %1057 = vmatprep.subr.mxu0 0.0
    %1058 = vmatpush1.msra.mxu0 0.0
    %1059 = vmatprep.subr.mxu0 0.0
    %1060 = vmatpush1.msra.mxu0 0.0
    %1061 = vmatprep.subr.mxu0 0.0
    %1062 = vmatpush1.msra.mxu0 0.0
    %1063 = vmatprep.subr.mxu0 0.0
    %1064 = vmatpush1.msra.mxu0 0.0
    %1065 = vmatprep.subr.mxu0 0.0
    %1066 = vmatpush1.msra.mxu0 0.0
    %1067 = vmatprep.subr.mxu0 0.0
    %1068 = vmatpush1.msra.mxu0 0.0
    %1069 = vmatprep.subr.mxu0 0.0
    %1070 = vmatpush1.msra.mxu0 0.0
    %1071 = vmatprep.subr.mxu0 0.0
    %1072 = vmatpush1.msra.mxu0 0.0
    %1073 = vmatprep.subr.mxu0 0.0
    %1074 = vmatpush1.msra.mxu0 0.0
    %1075 = vmatprep.subr.mxu0 0.0
    %1076 = vmatpush1.msra.mxu0 0.0
    %1077 = vmatprep.subr.mxu0 0.0
    %1078 = vmatpush1.msra.mxu0 0.0
    %1079 = vmatprep.subr.mxu0 0.0
    %1080 = vmatpush1.msra.mxu0 0.0
    %1081 = vmatprep.subr.mxu0 0.0
    %1082 = vmatpush1.msra.mxu0 0.0
    %1083 = vmatprep.subr.mxu0 0.0
    %1084 = vmatpush1.msra.mxu0 0.0
    %1085 = vmatprep.subr.mxu0 0.0
    %1086 = vmatpush1.msra.mxu0 0.0
    %1087 = vmatprep.subr.mxu0 0.0
    %1088 = vmatpush1.msra.mxu0 0.0
    %1089 = vmatprep.subr.mxu0 0.0
    %1090 = vmatpush1.msra.mxu0 0.0
    %1091 = vmatprep.mubr.f32.mxu0 0.0
    %1092 = vmatmul.mubr.f32.gmra.mrb[0].mxu0 %v1025
    %v1093 = vpop.f32.mrb[0].mxu0
    %v1094 = vadd.f32 %v1021, %v1093
    %v1095 = vpop.f32.mrb[0].mxu0
    %1096 = vdwg.mxu0
    %v1097 = vmax.f32 %v1094, 0.0
    %v1098 = vld [vmem:[%s2 + $0x1a0] sm:$0xff]
    %v1099 = vld [vmem:[%s2 + $0x1a8] sm:$0xff]
    %v1100 = vld [vmem:[%s2 + $0x1b0] sm:$0xff]
    %v1101 = vld [vmem:[%s2 + $0x1b8] sm:$0xff]
    %v1102 = vld [vmem:[%s2 + $0x1c0] sm:$0x1]
    %v1103 = vlaneseq
    %v1104 = vshrl.u32 %v1103, 7
    %v1105 = vsub.s32 0, %v1104
    %v1106 = vrot.slane %v1102, %v1105
    %v1108 = vsel %vm189, %v778, 0
    %1110 = vmatprep.subr.mxu0 0.0
    %1111 = vmatpush1.msra.mxu0 %v1098
    %1112 = vmatprep.subr.mxu0 0.0
    %1113 = vmatpush1.msra.mxu0 %v1099
    %1114 = vmatprep.subr.mxu0 0.0
    %1115 = vmatpush1.msra.mxu0 %v1100
    %1116 = vmatprep.subr.mxu0 0.0
    %1117 = vmatpush1.msra.mxu0 %v1101
    %1118 = vmatprep.subr.mxu0 0.0
    %1119 = vmatpush1.msra.mxu0 0.0
    %1120 = vmatprep.subr.mxu0 0.0
    %1121 = vmatpush1.msra.mxu0 0.0
    %1122 = vmatprep.subr.mxu0 0.0
    %1123 = vmatpush1.msra.mxu0 0.0
    %1124 = vmatprep.subr.mxu0 0.0
    %1125 = vmatpush1.msra.mxu0 0.0
    %1126 = vmatprep.subr.mxu0 0.0
    %1127 = vmatpush1.msra.mxu0 0.0
    %1128 = vmatprep.subr.mxu0 0.0
    %1129 = vmatpush1.msra.mxu0 0.0
    %1130 = vmatprep.subr.mxu0 0.0
    %1131 = vmatpush1.msra.mxu0 0.0
    %1132 = vmatprep.subr.mxu0 0.0
    %1133 = vmatpush1.msra.mxu0 0.0
    %1134 = vmatprep.subr.mxu0 0.0
    %1135 = vmatpush1.msra.mxu0 0.0
    %1136 = vmatprep.subr.mxu0 0.0
    %1137 = vmatpush1.msra.mxu0 0.0
    %1138 = vmatprep.subr.mxu0 0.0
    %1139 = vmatpush1.msra.mxu0 0.0
    %1140 = vmatprep.subr.mxu0 0.0
    %1141 = vmatpush1.msra.mxu0 0.0
    %1142 = vmatprep.subr.mxu0 0.0
    %1143 = vmatpush1.msra.mxu0 0.0
    %1144 = vmatprep.subr.mxu0 0.0
    %1145 = vmatpush1.msra.mxu0 0.0
    %1146 = vmatprep.subr.mxu0 0.0
    %1147 = vmatpush1.msra.mxu0 0.0
    %1148 = vmatprep.subr.mxu0 0.0
    %1149 = vmatpush1.msra.mxu0 0.0
    %1150 = vmatprep.subr.mxu0 0.0
    %1151 = vmatpush1.msra.mxu0 0.0
    %1152 = vmatprep.subr.mxu0 0.0
    %1153 = vmatpush1.msra.mxu0 0.0
    %1154 = vmatprep.subr.mxu0 0.0
    %1155 = vmatpush1.msra.mxu0 0.0
    %1156 = vmatprep.subr.mxu0 0.0
    %1157 = vmatpush1.msra.mxu0 0.0
    %1158 = vmatprep.subr.mxu0 0.0
    %1159 = vmatpush1.msra.mxu0 0.0
    %1160 = vmatprep.subr.mxu0 0.0
    %1161 = vmatpush1.msra.mxu0 0.0
    %1162 = vmatprep.subr.mxu0 0.0
    %1163 = vmatpush1.msra.mxu0 0.0
    %1164 = vmatprep.subr.mxu0 0.0
    %1165 = vmatpush1.msra.mxu0 0.0
    %1166 = vmatprep.subr.mxu0 0.0
    %1167 = vmatpush1.msra.mxu0 0.0
    %1168 = vmatprep.subr.mxu0 0.0
    %1169 = vmatpush1.msra.mxu0 0.0
    %1170 = vmatprep.subr.mxu0 0.0
    %1171 = vmatpush1.msra.mxu0 0.0
    %1172 = vmatprep.subr.mxu0 0.0
    %1173 = vmatpush1.msra.mxu0 0.0
    %1174 = vmatprep.mubr.f32.mxu0 0.0
    %1175 = vmatmul.mubr.f32.gmra.mrb[0].mxu0 %v1108
    %v1176 = vpop.f32.mrb[0].mxu0
    %v1177 = vadd.f32 %v1106, %v1176
    %v1178 = vpop.f32.mrb[0].mxu0
    %1179 = vdwg.mxu0
    %v1180 = vmax.f32 %v1177, 0.0
    %v1181 = vld [vmem:[%s2 + $0x1c8] sm:$0xff]
    %v1182 = vld [vmem:[%s2 + $0x1d0] sm:$0xff]
    %v1183 = vld [vmem:[%s2 + $0x1d8] sm:$0xff]
    %v1184 = vld [vmem:[%s2 + $0x1e0] sm:$0xff]
    %v1185 = vld [vmem:[%s2 + $0x1e8] sm:$0x1]
    %v1186 = vlaneseq
    %v1187 = vshrl.u32 %v1186, 7
    %v1188 = vsub.s32 0, %v1187
    %v1189 = vrot.slane %v1185, %v1188
    %v1191 = vsel %vm189, %v1180, 0
    %1193 = vmatprep.subr.mxu0 0.0
    %1194 = vmatpush1.msra.mxu0 %v1181
    %1195 = vmatprep.subr.mxu0 0.0
    %1196 = vmatpush1.msra.mxu0 %v1182
    %1197 = vmatprep.subr.mxu0 0.0
    %1198 = vmatpush1.msra.mxu0 %v1183
    %1199 = vmatprep.subr.mxu0 0.0
    %1200 = vmatpush1.msra.mxu0 %v1184
    %1201 = vmatprep.subr.mxu0 0.0
    %1202 = vmatpush1.msra.mxu0 0.0
    %1203 = vmatprep.subr.mxu0 0.0
    %1204 = vmatpush1.msra.mxu0 0.0
    %1205 = vmatprep.subr.mxu0 0.0
    %1206 = vmatpush1.msra.mxu0 0.0
    %1207 = vmatprep.subr.mxu0 0.0
    %1208 = vmatpush1.msra.mxu0 0.0
    %1209 = vmatprep.subr.mxu0 0.0
    %1210 = vmatpush1.msra.mxu0 0.0
    %1211 = vmatprep.subr.mxu0 0.0
    %1212 = vmatpush1.msra.mxu0 0.0
    %1213 = vmatprep.subr.mxu0 0.0
    %1214 = vmatpush1.msra.mxu0 0.0
    %1215 = vmatprep.subr.mxu0 0.0
    %1216 = vmatpush1.msra.mxu0 0.0
    %1217 = vmatprep.subr.mxu0 0.0
    %1218 = vmatpush1.msra.mxu0 0.0
    %1219 = vmatprep.subr.mxu0 0.0
    %1220 = vmatpush1.msra.mxu0 0.0
    %1221 = vmatprep.subr.mxu0 0.0
    %1222 = vmatpush1.msra.mxu0 0.0
    %1223 = vmatprep.subr.mxu0 0.0
    %1224 = vmatpush1.msra.mxu0 0.0
    %1225 = vmatprep.subr.mxu0 0.0
    %1226 = vmatpush1.msra.mxu0 0.0
    %1227 = vmatprep.subr.mxu0 0.0
    %1228 = vmatpush1.msra.mxu0 0.0
    %1229 = vmatprep.subr.mxu0 0.0
    %1230 = vmatpush1.msra.mxu0 0.0
    %1231 = vmatprep.subr.mxu0 0.0
    %1232 = vmatpush1.msra.mxu0 0.0
    %1233 = vmatprep.subr.mxu0 0.0
    %1234 = vmatpush1.msra.mxu0 0.0
    %1235 = vmatprep.subr.mxu0 0.0
    %1236 = vmatpush1.msra.mxu0 0.0
    %1237 = vmatprep.subr.mxu0 0.0
    %1238 = vmatpush1.msra.mxu0 0.0
    %1239 = vmatprep.subr.mxu0 0.0
    %1240 = vmatpush1.msra.mxu0 0.0
    %1241 = vmatprep.subr.mxu0 0.0
    %1242 = vmatpush1.msra.mxu0 0.0
    %1243 = vmatprep.subr.mxu0 0.0
    %1244 = vmatpush1.msra.mxu0 0.0
    %1245 = vmatprep.subr.mxu0 0.0
    %1246 = vmatpush1.msra.mxu0 0.0
    %1247 = vmatprep.subr.mxu0 0.0
    %1248 = vmatpush1.msra.mxu0 0.0
    %1249 = vmatprep.subr.mxu0 0.0
    %1250 = vmatpush1.msra.mxu0 0.0
    %1251 = vmatprep.subr.mxu0 0.0
    %1252 = vmatpush1.msra.mxu0 0.0
    %1253 = vmatprep.subr.mxu0 0.0
    %1254 = vmatpush1.msra.mxu0 0.0
    %1255 = vmatprep.subr.mxu0 0.0
    %1256 = vmatpush1.msra.mxu0 0.0
    %1257 = vmatprep.mubr.f32.mxu0 0.0
    %1258 = vmatmul.mubr.f32.gmra.mrb[0].mxu0 %v1191
    %v1259 = vpop.f32.mrb[0].mxu0
    %v1260 = vadd.f32 %v1189, %v1259
    %v1261 = vpop.f32.mrb[0].mxu0
    %1262 = vdwg.mxu0
    %v1263 = vadd.f32 %v1009, %v1260
    %v1264 = vmul.f32 %v1009, 1.442695
    %v1265 = vpow.pop %v1264
    %v1266 = vld [vmem:[%s2 + $0x200] sm:$0xff]
    %1268 = vrot.lane.b32.xlu0 %v1265, 112
    %v1269 = vpop.permute.xlu0 %1268
    %v1271 = vmul.f32 %v1266, %v1269
    %v1272 = vadd.f32 %v1263, %v1271
    %v1273 = vsub.f32 %v19, %v1272
    %v1274 = vmul.f32 %v1273, %v1273
    %v1275 = vsel %vm105, %v1274, 0.0
    %1276 = vadd.xlane.f32.xlu0 %v1275
    %v1277 = vpop.xlane.xlu0 %1276
    %v1278 = vrot.slane %v1277, 4
    %v1279 = vadd.f32 %v1277, %v1278
    %v1280 = vrot.slane %v1279, 2
    %v1281 = vadd.f32 %v1279, %v1280
    %v1282 = vrot.slane %v1281, 1
    %v1283 = vadd.f32 %v1281, %v1282
    %v1284 = vmul.f32 %v1283, 0.0078125
    %v1285 = vadd.f32 %v791, %v1284
    %v1286 = vmul.f32 %v97, %v795
    %v1287 = vsub.f32 %v1263, %v1286
    %v1288 = vmul.f32 %v1009, 2.0
    %v1289 = vsub.f32 -1.0, %v1288
    %v1290 = vmul.f32 %v1287, %v1287
    %1292 = vrot.lane.b32.xlu0 %v1290, 16
    %v1293 = vpop.permute.xlu0 %1292
    %v1295 = vadd.f32 %v1289, %v1293
    %v1296 = vmul.f32 %v1265, %v1265
    %v1297 = vadd.f32 %v1295, %v1296
    %1299 = vrot.lane.b32.xlu0 %v1297, 112
    %v1300 = vpop.permute.xlu0 %1299
    %v1302 = vsel %vm105, %v1300, 0.0
    %1303 = vadd.xlane.f32.xlu0 %v1302
    %v1304 = vpop.xlane.xlu0 %1303
    %v1305 = vrot.slane %v1304, 4
    %v1306 = vadd.f32 %v1304, %v1305
    %v1307 = vrot.slane %v1306, 2
    %v1308 = vadd.f32 %v1306, %v1307
    %v1309 = vrot.slane %v1308, 1
    %v1310 = vadd.f32 %v1308, %v1309
    %v1311 = vmul.f32 %v1310, 0.0078125
    %v1312 = vmul.f32 %v1311, 0.5
    %v1313 = vadd.f32 %v824, %v1312
    %v1314 = vsub.f32 %v1097, %v20
    %v1315 = vmul.f32 %v1314, %v1314
    %v1316 = vadd.f32 %v1315, 0.0
    %v1317 = vsel %vm828, %v1316, 0.0
    %v1318 = vrot.slane %v1317, 4
    %v1319 = vadd.f32 %v1317, %v1318
    %v1320 = vrot.slane %v1319, 2
    %v1321 = vadd.f32 %v1319, %v1320
    %v1322 = vrot.slane %v1321, 1
    %v1323 = vadd.f32 %v1321, %v1322
    %v1324 = vmul.f32 %v1323, 0.125
    %v1325 = vadd.f32 %v837, %v1324
    %v1326 = vmul.f32 %v1313, 0.0001
    %v1327 = vadd.f32 %v1285, %v1326
    %v1328 = vmul.f32 %v1325, 10.0
    %v1329 = vadd.f32 %v1327, %v1328
    %v1330 = vmul.f32 %v1329, 0.5
    %vm1331 = vcmask 0
    %1332 = vst.msk [vmem:[#allocation2] sm:$0x1] %vm1331, %v1330
    %1333 = vst.msk [vmem:[#allocation4] sm:$0xff] %vm105, %v517
    // Predicated region
    $region14: #{isoc_vgae_forward.3} parent=1 // pred_check
      _
    $region15: #{isoc_vgae_forward.3} parent=1 // pred_check_branch
      %1335 = sbr.rel (0) target = $region17
    $region16: #{isoc_vgae_forward.3} parent=1 // pred_region
      %s1337 = ssub.s32 16, 16
      %1338 = vsyncadd [#allocation3], %s1337
      %s1340 = sshll.u32 [#allocation2], 4
      %s1341 = int_to_ptr.vmem [resolvable:$true] %s1340
      %1343 = dma.vmem_to_hbm [thread:$0]  %s1341, 16, %s3, [#allocation3]
    $region17: #{isoc_vgae_forward.3} parent=1 // pred_fallthru
      _
    // Predicated region
    $region18: #{isoc_vgae_forward.3} parent=1 // pred_check
      _
    $region19: #{isoc_vgae_forward.3} parent=1 // pred_check_branch
      %1345 = sbr.rel (0) target = $region21
    $region20: #{isoc_vgae_forward.3} parent=1 // pred_region
      %s1347 = ssub.s32 128, 128
      %1348 = vsyncadd [#allocation5], %s1347
      %s1350 = sshll.u32 [#allocation4], 4
      %s1351 = int_to_ptr.vmem [resolvable:$true] %s1350
      %1353 = dma.vmem_to_hbm [thread:$0]  %s1351, 128, %s4, [#allocation5]
    $region21: #{isoc_vgae_forward.3} parent=1 // pred_fallthru
      _
    // Predicated region
    $region22: #{isoc_vgae_forward.3} parent=1 // pred_check
      _
    $region23: #{isoc_vgae_forward.3} parent=1 // pred_check_branch
      %1355 = sbr.rel (0) target = $region25
    $region24: #{isoc_vgae_forward.3} parent=1 // pred_region
      %1356 = dma.done [#allocation3], 16
    $region25: #{isoc_vgae_forward.3} parent=1 // pred_fallthru
      _
    // Predicated region
    $region26: #{isoc_vgae_forward.3} parent=1 // pred_check
      _
    $region27: #{isoc_vgae_forward.3} parent=1 // pred_check_branch
      %1358 = sbr.rel (0) target = $region29
    $region28: #{isoc_vgae_forward.3} parent=1 // pred_region
      %1359 = dma.done [#allocation5], 128
    $region29: #{isoc_vgae_forward.3} parent=1 // pred_fallthru
      _
    %1360 = vsyncpa [#allocation3], 1
    %1361 = vsyncpa [#allocation5], 1

</llo_original>
